<compile_context>
chip_gen: v6e
topology: v6e:2x2x1
jax: 0.10.0
libtpu: 0.0.40
codegen_flags: <defaults>
</compile_context>

<pallas_src>
import jax
import jax.numpy as jnp
from jax.experimental import pallas as pl
from jax.experimental.pallas import tpu as pltpu

EPS = 1e-5

# DWT band-mixing matrix T[band b, parity p] with parity order
# p = (row parity r, col parity s) -> {0:(0,0)=x1, 1:(0,1)=x3, 2:(1,0)=x2, 3:(1,1)=x4}
#   LL = x1+x2+x3+x4 ; HL = -x1-x2+x3+x4 ; LH = -x1+x2-x3+x4 ; HH = x1-x2-x3+x4
_DWT_MIX = jnp.array([[1.,  1.,  1.,  1.],
                      [-1., 1., -1.,  1.],
                      [-1., -1., 1.,  1.],
                      [1., -1., -1.,  1.]], jnp.float32)


# ----------------------------- Pallas kernel --------------------------------
def _conv_bn_relu(x_nhwc, w_ref, g_ref, b_ref):
    """x_nhwc: (N, H, W, Cin) f32 value (unpadded).
    w_ref: Ref (9*Cin, Cq) flattened HWIO 3x3 taps (tap-major, channel-minor).
    Returns (N*H*W, Cq) f32 after conv(pad=1) -> BN(batch stats) -> ReLU."""
    N, H, W, Cin = x_nhwc.shape
    M = N * H * W

    # Functional zero-pad by 1 on both spatial dims (no scratch, no full fill).
    zrow = jnp.zeros((N, 1, W, Cin), jnp.float32)
    xp = jnp.concatenate([zrow, x_nhwc, zrow], axis=1)            # (N, H+2, W, Cin)
    zcol = jnp.zeros((N, H + 2, 1, Cin), jnp.float32)
    xp = jnp.concatenate([zcol, xp, zcol], axis=2)                # (N, H+2, W+2, Cin)

    # im2col: 9 shifted windows concatenated along the lane (channel) axis,
    # then one MXU matmul with K = 9*Cin instead of nine K=Cin dots.
    cols = [xp[:, dy:dy + H, dx:dx + W, :].reshape(M, Cin)
            for dy in range(3) for dx in range(3)]
    patch = jnp.concatenate(cols, axis=-1)                        # (M, 9*Cin)
    y = jnp.dot(patch, w_ref[...], preferred_element_type=jnp.float32)

    # One-pass training-mode BatchNorm (biased variance) folded to a per-channel
    # scale/shift, applied as a single FMA + ReLU.
    inv_m = 1.0 / M
    s1 = jnp.sum(y, axis=0, keepdims=True)
    s2 = jnp.sum(y * y, axis=0, keepdims=True)
    mean = s1 * inv_m
    var = s2 * inv_m - mean * mean
    scale = g_ref[...] * jax.lax.rsqrt(var + EPS)                 # (1, Cq)
    shift = b_ref[...] - mean * scale                             # (1, Cq)
    return jnp.maximum(y * scale + shift, 0.0)


def _part_dwt3_kernel(xq_ref, w1_ref, g1_ref, b1_ref, w2_ref, g2_ref, b2_ref,
                      out_ref):
    N, Hd, Wd, _ = xq_ref.shape
    Cmid = w1_ref.shape[-1]
    Cout = w2_ref.shape[-1]

    # xq channels are parity-ordered (r, s, c); the DWT mixing and 0.5 scale
    # are already folded into w1, so the first conv consumes xq directly.
    x = xq_ref[...].astype(jnp.float32)                            # (N, Hd, Wd, 4C)

    y1 = _conv_bn_relu(x, w1_ref, g1_ref, b1_ref)                  # (N*Hd*Wd, Cmid)
    y2 = _conv_bn_relu(y1.reshape(N, Hd, Wd, Cmid),
                       w2_ref, g2_ref, b2_ref)                     # (N*Hd*Wd, Cout)

    # Emit channel-major (NCHW-flat) so the wrapper only does a free reshape.
    y2 = jnp.swapaxes(y2.reshape(N, Hd * Wd, Cout), 1, 2)          # (N, Cout, Hd*Wd)
    out_ref[...] = y2.astype(out_ref.dtype)


# ------------------------------ JAX wrapper ----------------------------------
def part_dwt3_forward(x_nchw, params):
    """x_nchw: (N, C, H, W). Returns (N, Cout, H/2, W/2) matching part_dwt3."""
    w1, g1, b1, w2, g2, b2 = params            # w1: (3,3,4C,Cmid) HWIO, etc.
    N, C, H, W = x_nchw.shape
    Hd, Wd = H // 2, W // 2
    Cin = 4 * C
    Cmid = w1.shape[-1]
    Cout = w2.shape[-1]
    assert w1.shape == (3, 3, Cin, Cmid) and w2.shape == (3, 3, Cmid, Cout)

    # Single XLA transpose: NCHW -> parity/channel-last (N, Hd, Wd, 2*2*C).
    # This one op replaces the DWT strided slices, the NCHW->NHWC transpose
    # and the conv pre-pad (a sub-tile 6-D relayout is better left to XLA).
    xq = jnp.transpose(x_nchw.reshape(N, C, Hd, 2, Wd, 2), (0, 2, 4, 3, 5, 1))
    xq = xq.reshape(N, Hd, Wd, 4 * C)

    # Fold the DWT (0.5 * band mixing) into the first conv's weights:
    #   w1p[ky,kx, p*C+c, o] = 0.5 * sum_b T[b,p] * w1[ky,kx, b*C+c, o]
    w1p = 0.5 * jnp.einsum('bp,hwbco->hwpco', _DWT_MIX,
                           w1.reshape(3, 3, 4, C, Cmid))
    w1p = w1p.reshape(9 * Cin, Cmid)

    out = pl.pallas_call(
        _part_dwt3_kernel,
        out_shape=jax.ShapeDtypeStruct((N, Cout, Hd * Wd), x_nchw.dtype),
        in_specs=[pl.BlockSpec(memory_space=pltpu.MemorySpace.VMEM)] * 7,
        out_specs=pl.BlockSpec(memory_space=pltpu.MemorySpace.VMEM),
    )(xq,
      w1p, g1.reshape(1, Cmid), b1.reshape(1, Cmid),
      w2.reshape(9 * Cmid, Cout), g2.reshape(1, Cout), b2.reshape(1, Cout))
    return out.reshape(N, Cout, Hd, Wd)        # free row-major reshape


def init_params(key, in_channels, out_channels, mid_channels=None):
    if mid_channels is None:
        mid_channels = out_channels
    k1, k2, k3, k4 = jax.random.split(key, 4)
    w1 = jax.random.uniform(k1, (3, 3, in_channels, mid_channels), jnp.float32,
                            -1.0, 1.0) / jnp.sqrt(9.0 * in_channels)
    w2 = jax.random.uniform(k2, (3, 3, mid_channels, out_channels), jnp.float32,
                            -1.0, 1.0) / jnp.sqrt(9.0 * mid_channels)
    g1 = 1.0 + 0.1 * jax.random.uniform(k3, (mid_channels,), jnp.float32)
    b1 = 0.1 * jax.random.normal(k4, (mid_channels,), jnp.float32)
    g2 = 1.0 + 0.1 * jax.random.uniform(k4, (out_channels,), jnp.float32)
    b2 = 0.1 * jax.random.normal(k3, (out_channels,), jnp.float32)
    return w1, g1, b1, w2, g2, b2


# --------------------------- pure-JAX reference ------------------------------
def dwt_init_jax(x):
    x01 = x[:, :, 0::2, :] / 2
    x02 = x[:, :, 1::2, :] / 2
    x1 = x01[:, :, :, 0::2]
    x2 = x02[:, :, :, 0::2]
    x3 = x01[:, :, :, 1::2]
    x4 = x02[:, :, :, 1::2]
    x_LL = x1 + x2 + x3 + x4
    x_HL = -x1 - x2 + x3 + x4
    x_LH = -x1 + x2 - x3 + x4
    x_HH = x1 - x2 - x3 + x4
    return x_LL, jnp.concatenate((x_LL, x_HL, x_LH, x_HH), axis=1)


def ref_forward(x_nchw, params):
    w1, g1, b1, w2, g2, b2 = params
    _, x_dwt = dwt_init_jax(x_nchw)
    x = jnp.transpose(x_dwt, (0, 2, 3, 1))

    def conv(x, w):
        return jax.lax.conv_general_dilated(
            x, w, (1, 1), 'SAME', dimension_numbers=('NHWC', 'HWIO', 'NHWC'))

    def bn_relu(y, g, b):
        m = jnp.mean(y, axis=(0, 1, 2), keepdims=True)
        v = jnp.mean(jnp.square(y - m), axis=(0, 1, 2), keepdims=True)
        yn = (y - m) * jax.lax.rsqrt(v + EPS)
        yn = yn * g.reshape(1, 1, 1, -1) + b.reshape(1, 1, 1, -1)
        return jnp.maximum(yn, 0.0)

    y = bn_relu(conv(x, w1), g1, b1)
    y = bn_relu(conv(y, w2), g2, b2)
    return jnp.transpose(y, (0, 3, 1, 2))


# --------------------------------- main ---------------------------------------
if __name__ == "__main__":
    key = jax.random.PRNGKey(0)
    kx, kp = jax.random.split(key)

    N, C, H, W = 2, 4, 16, 16
    x = jax.random.normal(kx, (N, C, H, W), jnp.float32)

    in_channels = 4 * C          # DWT quadruples the channel count
    out_channels = 8
    params = init_params(kp, in_channels, out_channels)

    fwd = jax.jit(part_dwt3_forward)
    out = jax.block_until_ready(fwd(x, params))
    assert out.shape == (N, out_channels, H // 2, W // 2), out.shape

    ref = ref_forward(x, params)
    err = float(jnp.max(jnp.abs(out - ref)))
    assert err < 1e-2, f"max abs error vs reference: {err}"

    print("KERNEL_OK")
</pallas_src>

<mosaic_0001>
module attributes {stable_mosaic.version = 11 : i64} {
  func.func @_part_dwt3_kernel(%arg0: memref<2x8x8x16xf32, #tpu.memory_space<vmem>>, %arg1: memref<144x8xf32, #tpu.memory_space<vmem>>, %arg2: memref<1x8xf32, #tpu.memory_space<vmem>>, %arg3: memref<1x8xf32, #tpu.memory_space<vmem>>, %arg4: memref<72x8xf32, #tpu.memory_space<vmem>>, %arg5: memref<1x8xf32, #tpu.memory_space<vmem>>, %arg6: memref<1x8xf32, #tpu.memory_space<vmem>>, %arg7: memref<2x8x64xf32, #tpu.memory_space<vmem>>) attributes {dimension_semantics = [], scalar_prefetch = 0 : i64, scratch_operands = 0 : i64, tpu.core_type = #tpu.core_type<tc>} {
    %c0 = arith.constant 0 : index
    %c0_0 = arith.constant 0 : index
    %c0_1 = arith.constant 0 : index
    %c0_2 = arith.constant 0 : index
    %0 = vector.load %arg0[%c0, %c0_0, %c0_1, %c0_2] : memref<2x8x8x16xf32, #tpu.memory_space<vmem>>, vector<2x8x8x16xf32>
    %cst = arith.constant 0.000000e+00 : f32
    %1 = vector.broadcast %cst : f32 to vector<2x1x8x16xf32>
    %2 = tpu.concatenate %1, %0, %1 in 1 : vector<2x1x8x16xf32>, vector<2x8x8x16xf32>, vector<2x1x8x16xf32> -> vector<2x10x8x16xf32>
    %cst_3 = arith.constant 0.000000e+00 : f32
    %3 = vector.broadcast %cst_3 : f32 to vector<2x10x1x16xf32>
    %4 = tpu.concatenate %3, %2, %3 in 2 : vector<2x10x1x16xf32>, vector<2x10x8x16xf32>, vector<2x10x1x16xf32> -> vector<2x10x10x16xf32>
    %5 = vector.extract_strided_slice %4 {offsets = [0, 0, 0, 0], sizes = [2, 8, 8, 16], strides = [1, 1, 1, 1]} : vector<2x10x10x16xf32> to vector<2x8x8x16xf32>
    %6 = vector.shape_cast %5 : vector<2x8x8x16xf32> to vector<128x16xf32>
    %7 = vector.extract_strided_slice %4 {offsets = [0, 0, 1, 0], sizes = [2, 8, 8, 16], strides = [1, 1, 1, 1]} : vector<2x10x10x16xf32> to vector<2x8x8x16xf32>
    %8 = vector.shape_cast %7 : vector<2x8x8x16xf32> to vector<128x16xf32>
    %9 = vector.extract_strided_slice %4 {offsets = [0, 0, 2, 0], sizes = [2, 8, 8, 16], strides = [1, 1, 1, 1]} : vector<2x10x10x16xf32> to vector<2x8x8x16xf32>
    %10 = vector.shape_cast %9 : vector<2x8x8x16xf32> to vector<128x16xf32>
    %11 = vector.extract_strided_slice %4 {offsets = [0, 1, 0, 0], sizes = [2, 8, 8, 16], strides = [1, 1, 1, 1]} : vector<2x10x10x16xf32> to vector<2x8x8x16xf32>
    %12 = vector.shape_cast %11 : vector<2x8x8x16xf32> to vector<128x16xf32>
    %13 = vector.extract_strided_slice %4 {offsets = [0, 1, 1, 0], sizes = [2, 8, 8, 16], strides = [1, 1, 1, 1]} : vector<2x10x10x16xf32> to vector<2x8x8x16xf32>
    %14 = vector.shape_cast %13 : vector<2x8x8x16xf32> to vector<128x16xf32>
    %15 = vector.extract_strided_slice %4 {offsets = [0, 1, 2, 0], sizes = [2, 8, 8, 16], strides = [1, 1, 1, 1]} : vector<2x10x10x16xf32> to vector<2x8x8x16xf32>
    %16 = vector.shape_cast %15 : vector<2x8x8x16xf32> to vector<128x16xf32>
    %17 = vector.extract_strided_slice %4 {offsets = [0, 2, 0, 0], sizes = [2, 8, 8, 16], strides = [1, 1, 1, 1]} : vector<2x10x10x16xf32> to vector<2x8x8x16xf32>
    %18 = vector.shape_cast %17 : vector<2x8x8x16xf32> to vector<128x16xf32>
    %19 = vector.extract_strided_slice %4 {offsets = [0, 2, 1, 0], sizes = [2, 8, 8, 16], strides = [1, 1, 1, 1]} : vector<2x10x10x16xf32> to vector<2x8x8x16xf32>
    %20 = vector.shape_cast %19 : vector<2x8x8x16xf32> to vector<128x16xf32>
    %21 = vector.extract_strided_slice %4 {offsets = [0, 2, 2, 0], sizes = [2, 8, 8, 16], strides = [1, 1, 1, 1]} : vector<2x10x10x16xf32> to vector<2x8x8x16xf32>
    %22 = vector.shape_cast %21 : vector<2x8x8x16xf32> to vector<128x16xf32>
    %23 = tpu.concatenate %6, %8, %10, %12, %14, %16, %18, %20, %22 in 1 : vector<128x16xf32>, vector<128x16xf32>, vector<128x16xf32>, vector<128x16xf32>, vector<128x16xf32>, vector<128x16xf32>, vector<128x16xf32>, vector<128x16xf32>, vector<128x16xf32> -> vector<128x144xf32>
    %c0_4 = arith.constant 0 : index
    %c0_5 = arith.constant 0 : index
    %24 = vector.load %arg1[%c0_4, %c0_5] : memref<144x8xf32, #tpu.memory_space<vmem>>, vector<144x8xf32>
    %cst_6 = arith.constant dense<0.000000e+00> : vector<128x8xf32>
    %25 = tpu.matmul %23, %24, %cst_6 {dimension_numbers = #tpu.dot_dimension_numbers<[1], [0], [0], [1], [0, 0, 1, 1], [], []>} : vector<128x144xf32>, vector<144x8xf32>, vector<128x8xf32> -> vector<128x8xf32>
    %cst_7 = arith.constant dense<0.000000e+00> : vector<8xf32>
    %26 = vector.multi_reduction <add>, %25, %cst_7 [0] : vector<128x8xf32> to vector<8xf32>
    %27 = vector.shape_cast %26 : vector<8xf32> to vector<1x8xf32>
    %28 = arith.mulf %25, %25 : vector<128x8xf32>
    %cst_8 = arith.constant dense<0.000000e+00> : vector<8xf32>
    %29 = vector.multi_reduction <add>, %28, %cst_8 [0] : vector<128x8xf32> to vector<8xf32>
    %30 = vector.shape_cast %29 : vector<8xf32> to vector<1x8xf32>
    %cst_9 = arith.constant 7.812500e-03 : f32
    %31 = vector.broadcast %cst_9 : f32 to vector<1x8xf32>
    %32 = arith.mulf %27, %31 : vector<1x8xf32>
    %cst_10 = arith.constant 7.812500e-03 : f32
    %33 = vector.broadcast %cst_10 : f32 to vector<1x8xf32>
    %34 = arith.mulf %30, %33 : vector<1x8xf32>
    %35 = arith.mulf %32, %32 : vector<1x8xf32>
    %36 = arith.subf %34, %35 : vector<1x8xf32>
    %c0_11 = arith.constant 0 : index
    %c0_12 = arith.constant 0 : index
    %37 = vector.load %arg2[%c0_11, %c0_12] : memref<1x8xf32, #tpu.memory_space<vmem>>, vector<1x8xf32>
    %cst_13 = arith.constant 9.99999974E-6 : f32
    %38 = vector.broadcast %cst_13 : f32 to vector<1x8xf32>
    %39 = arith.addf %36, %38 : vector<1x8xf32>
    %40 = math.rsqrt %39 : vector<1x8xf32>
    %41 = arith.mulf %37, %40 : vector<1x8xf32>
    %c0_14 = arith.constant 0 : index
    %c0_15 = arith.constant 0 : index
    %42 = vector.load %arg3[%c0_14, %c0_15] : memref<1x8xf32, #tpu.memory_space<vmem>>, vector<1x8xf32>
    %43 = arith.mulf %32, %41 : vector<1x8xf32>
    %44 = arith.subf %42, %43 : vector<1x8xf32>
    %45 = vector.broadcast %41 : vector<1x8xf32> to vector<128x8xf32>
    %46 = arith.mulf %25, %45 : vector<128x8xf32>
    %47 = vector.broadcast %44 : vector<1x8xf32> to vector<128x8xf32>
    %48 = arith.addf %46, %47 : vector<128x8xf32>
    %cst_16 = arith.constant 0.000000e+00 : f32
    %49 = vector.broadcast %cst_16 : f32 to vector<128x8xf32>
    %50 = arith.maximumf %48, %49 : vector<128x8xf32>
    %51 = vector.shape_cast %50 : vector<128x8xf32> to vector<2x8x8x8xf32>
    %cst_17 = arith.constant 0.000000e+00 : f32
    %52 = vector.broadcast %cst_17 : f32 to vector<2x1x8x8xf32>
    %53 = tpu.concatenate %52, %51, %52 in 1 : vector<2x1x8x8xf32>, vector<2x8x8x8xf32>, vector<2x1x8x8xf32> -> vector<2x10x8x8xf32>
    %cst_18 = arith.constant 0.000000e+00 : f32
    %54 = vector.broadcast %cst_18 : f32 to vector<2x10x1x8xf32>
    %55 = tpu.concatenate %54, %53, %54 in 2 : vector<2x10x1x8xf32>, vector<2x10x8x8xf32>, vector<2x10x1x8xf32> -> vector<2x10x10x8xf32>
    %56 = vector.extract_strided_slice %55 {offsets = [0, 0, 0, 0], sizes = [2, 8, 8, 8], strides = [1, 1, 1, 1]} : vector<2x10x10x8xf32> to vector<2x8x8x8xf32>
    %57 = vector.shape_cast %56 : vector<2x8x8x8xf32> to vector<128x8xf32>
    %58 = vector.extract_strided_slice %55 {offsets = [0, 0, 1, 0], sizes = [2, 8, 8, 8], strides = [1, 1, 1, 1]} : vector<2x10x10x8xf32> to vector<2x8x8x8xf32>
    %59 = vector.shape_cast %58 : vector<2x8x8x8xf32> to vector<128x8xf32>
    %60 = vector.extract_strided_slice %55 {offsets = [0, 0, 2, 0], sizes = [2, 8, 8, 8], strides = [1, 1, 1, 1]} : vector<2x10x10x8xf32> to vector<2x8x8x8xf32>
    %61 = vector.shape_cast %60 : vector<2x8x8x8xf32> to vector<128x8xf32>
    %62 = vector.extract_strided_slice %55 {offsets = [0, 1, 0, 0], sizes = [2, 8, 8, 8], strides = [1, 1, 1, 1]} : vector<2x10x10x8xf32> to vector<2x8x8x8xf32>
    %63 = vector.shape_cast %62 : vector<2x8x8x8xf32> to vector<128x8xf32>
    %64 = vector.extract_strided_slice %55 {offsets = [0, 1, 1, 0], sizes = [2, 8, 8, 8], strides = [1, 1, 1, 1]} : vector<2x10x10x8xf32> to vector<2x8x8x8xf32>
    %65 = vector.shape_cast %64 : vector<2x8x8x8xf32> to vector<128x8xf32>
    %66 = vector.extract_strided_slice %55 {offsets = [0, 1, 2, 0], sizes = [2, 8, 8, 8], strides = [1, 1, 1, 1]} : vector<2x10x10x8xf32> to vector<2x8x8x8xf32>
    %67 = vector.shape_cast %66 : vector<2x8x8x8xf32> to vector<128x8xf32>
    %68 = vector.extract_strided_slice %55 {offsets = [0, 2, 0, 0], sizes = [2, 8, 8, 8], strides = [1, 1, 1, 1]} : vector<2x10x10x8xf32> to vector<2x8x8x8xf32>
    %69 = vector.shape_cast %68 : vector<2x8x8x8xf32> to vector<128x8xf32>
    %70 = vector.extract_strided_slice %55 {offsets = [0, 2, 1, 0], sizes = [2, 8, 8, 8], strides = [1, 1, 1, 1]} : vector<2x10x10x8xf32> to vector<2x8x8x8xf32>
    %71 = vector.shape_cast %70 : vector<2x8x8x8xf32> to vector<128x8xf32>
    %72 = vector.extract_strided_slice %55 {offsets = [0, 2, 2, 0], sizes = [2, 8, 8, 8], strides = [1, 1, 1, 1]} : vector<2x10x10x8xf32> to vector<2x8x8x8xf32>
    %73 = vector.shape_cast %72 : vector<2x8x8x8xf32> to vector<128x8xf32>
    %74 = tpu.concatenate %57, %59, %61, %63, %65, %67, %69, %71, %73 in 1 : vector<128x8xf32>, vector<128x8xf32>, vector<128x8xf32>, vector<128x8xf32>, vector<128x8xf32>, vector<128x8xf32>, vector<128x8xf32>, vector<128x8xf32>, vector<128x8xf32> -> vector<128x72xf32>
    %c0_19 = arith.constant 0 : index
    %c0_20 = arith.constant 0 : index
    %75 = vector.load %arg4[%c0_19, %c0_20] : memref<72x8xf32, #tpu.memory_space<vmem>>, vector<72x8xf32>
    %cst_21 = arith.constant dense<0.000000e+00> : vector<128x8xf32>
    %76 = tpu.matmul %74, %75, %cst_21 {dimension_numbers = #tpu.dot_dimension_numbers<[1], [0], [0], [1], [0, 0, 1, 1], [], []>} : vector<128x72xf32>, vector<72x8xf32>, vector<128x8xf32> -> vector<128x8xf32>
    %cst_22 = arith.constant dense<0.000000e+00> : vector<8xf32>
    %77 = vector.multi_reduction <add>, %76, %cst_22 [0] : vector<128x8xf32> to vector<8xf32>
    %78 = vector.shape_cast %77 : vector<8xf32> to vector<1x8xf32>
    %79 = arith.mulf %76, %76 : vector<128x8xf32>
    %cst_23 = arith.constant dense<0.000000e+00> : vector<8xf32>
    %80 = vector.multi_reduction <add>, %79, %cst_23 [0] : vector<128x8xf32> to vector<8xf32>
    %81 = vector.shape_cast %80 : vector<8xf32> to vector<1x8xf32>
    %cst_24 = arith.constant 7.812500e-03 : f32
    %82 = vector.broadcast %cst_24 : f32 to vector<1x8xf32>
    %83 = arith.mulf %78, %82 : vector<1x8xf32>
    %cst_25 = arith.constant 7.812500e-03 : f32
    %84 = vector.broadcast %cst_25 : f32 to vector<1x8xf32>
    %85 = arith.mulf %81, %84 : vector<1x8xf32>
    %86 = arith.mulf %83, %83 : vector<1x8xf32>
    %87 = arith.subf %85, %86 : vector<1x8xf32>
    %c0_26 = arith.constant 0 : index
    %c0_27 = arith.constant 0 : index
    %88 = vector.load %arg5[%c0_26, %c0_27] : memref<1x8xf32, #tpu.memory_space<vmem>>, vector<1x8xf32>
    %cst_28 = arith.constant 9.99999974E-6 : f32
    %89 = vector.broadcast %cst_28 : f32 to vector<1x8xf32>
    %90 = arith.addf %87, %89 : vector<1x8xf32>
    %91 = math.rsqrt %90 : vector<1x8xf32>
    %92 = arith.mulf %88, %91 : vector<1x8xf32>
    %c0_29 = arith.constant 0 : index
    %c0_30 = arith.constant 0 : index
    %93 = vector.load %arg6[%c0_29, %c0_30] : memref<1x8xf32, #tpu.memory_space<vmem>>, vector<1x8xf32>
    %94 = arith.mulf %83, %92 : vector<1x8xf32>
    %95 = arith.subf %93, %94 : vector<1x8xf32>
    %96 = vector.broadcast %92 : vector<1x8xf32> to vector<128x8xf32>
    %97 = arith.mulf %76, %96 : vector<128x8xf32>
    %98 = vector.broadcast %95 : vector<1x8xf32> to vector<128x8xf32>
    %99 = arith.addf %97, %98 : vector<128x8xf32>
    %cst_31 = arith.constant 0.000000e+00 : f32
    %100 = vector.broadcast %cst_31 : f32 to vector<128x8xf32>
    %101 = arith.maximumf %99, %100 : vector<128x8xf32>
    %102 = vector.shape_cast %101 : vector<128x8xf32> to vector<2x64x8xf32>
    %103 = tpu.transpose %102, [0, 2, 1] : vector<2x64x8xf32> -> vector<2x8x64xf32>
    %c0_32 = arith.constant 0 : index
    %c0_33 = arith.constant 0 : index
    %c0_34 = arith.constant 0 : index
    %104 = vector.load %arg7[%c0_32, %c0_33, %c0_34] : memref<2x8x64xf32, #tpu.memory_space<vmem>>, vector<2x8x64xf32>
    tpu.vector_store %arg7[%c0_32, %c0_33, %c0_34], %103 {strides = array<i32>} : memref<2x8x64xf32, #tpu.memory_space<vmem>>, vector<2x8x64xf32>,
    return
  }
}

</mosaic_0001>

<llo_original>
// kernel: part_dwt3_forward.1
$region0: #{part_dwt3_forward.1}
  #allocation0 [shape = 'u32[]', space=smem, size = 0x4, offset = 0x4, fixed_abs, tag = 'smem constant byte address 0x4 - core index']
  #allocation1 [shape = 'u32[144,128]{1,0:T(1,128)}', space=vmem, size = 0x12000, scoped, tag = 'internal scratch']
  %s0 = inlined_call_operand.vmem [shape: f32[2,8,8,16], index: 0, kind: input, shape index: {}]
  %s1 = inlined_call_operand.vmem [shape: f32[144,8], index: 1, kind: input, shape index: {}]
  %s2 = inlined_call_operand.vmem [shape: f32[1,8], index: 2, kind: input, shape index: {}]
  %s3 = inlined_call_operand.vmem [shape: f32[1,8], index: 3, kind: input, shape index: {}]
  %s4 = inlined_call_operand.vmem [shape: f32[72,8], index: 4, kind: input, shape index: {}]
  %s5 = inlined_call_operand.vmem [shape: f32[1,8], index: 5, kind: input, shape index: {}]
  %s6 = inlined_call_operand.vmem [shape: f32[1,8], index: 6, kind: input, shape index: {}]
  %s7 = inlined_call_operand.vmem [shape: f32[2,8,64], index: 7, kind: output, shape index: {}]
  %s8 = sld [smem:[#allocation0]]
  $region38: #{part_dwt3_forward.1} parent=0
    _
  %s10 = ssub.s32 1, %s8
  %s11 = scalar_select 0, %s10, %s8
  // Predicated region
  $region2: #{part_dwt3_forward.1} parent=0 // pred_check
    _
  $region3: #{part_dwt3_forward.1} parent=0 // pred_check_branch
    %13 = sbr.rel (0) target = $region5
  $region4: #{part_dwt3_forward.1} parent=0 // pred_region
    _
  $region5: #{part_dwt3_forward.1} parent=0 // pred_fallthru
    _
  // Predicated region
  $region6: #{part_dwt3_forward.1} parent=0 // pred_check
    _
  $region7: #{part_dwt3_forward.1} parent=0 // pred_check_branch
    %15 = sbr.rel (0) target = $region9
  $region8: #{part_dwt3_forward.1} parent=0 // pred_region
    _
  $region9: #{part_dwt3_forward.1} parent=0 // pred_fallthru
    _
  // Predicated region
  $region10: #{part_dwt3_forward.1} parent=0 // pred_check
    _
  $region11: #{part_dwt3_forward.1} parent=0 // pred_check_branch
    %17 = sbr.rel (0) target = $region13
  $region12: #{part_dwt3_forward.1} parent=0 // pred_region
    _
  $region13: #{part_dwt3_forward.1} parent=0 // pred_fallthru
    _
  // Predicated region
  $region14: #{part_dwt3_forward.1} parent=0 // pred_check
    _
  $region15: #{part_dwt3_forward.1} parent=0 // pred_check_branch
    %19 = sbr.rel (0) target = $region17
  $region16: #{part_dwt3_forward.1} parent=0 // pred_region
    _
  $region17: #{part_dwt3_forward.1} parent=0 // pred_fallthru
    _
  // Predicated region
  $region18: #{part_dwt3_forward.1} parent=0 // pred_check
    _
  $region19: #{part_dwt3_forward.1} parent=0 // pred_check_branch
    %21 = sbr.rel (0) target = $region21
  $region20: #{part_dwt3_forward.1} parent=0 // pred_region
    _
  $region21: #{part_dwt3_forward.1} parent=0 // pred_fallthru
    _
  // Predicated region
  $region22: #{part_dwt3_forward.1} parent=0 // pred_check
    _
  $region23: #{part_dwt3_forward.1} parent=0 // pred_check_branch
    %23 = sbr.rel (0) target = $region25
  $region24: #{part_dwt3_forward.1} parent=0 // pred_region
    _
  $region25: #{part_dwt3_forward.1} parent=0 // pred_fallthru
    _
  // Predicated region
  $region26: #{part_dwt3_forward.1} parent=0 // pred_check
    _
  $region27: #{part_dwt3_forward.1} parent=0 // pred_check_branch
    %25 = sbr.rel (0) target = $region29
  $region28: #{part_dwt3_forward.1} parent=0 // pred_region
    _
  $region29: #{part_dwt3_forward.1} parent=0 // pred_fallthru
    _
  %v26 = vld [vmem:[%s0] sm:$0xff]
  %v27 = vld [vmem:[%s0 + $0x8] sm:$0xff]
  %v28 = vld [vmem:[%s0 + $0x10] sm:$0xff]
  %v29 = vld [vmem:[%s0 + $0x18] sm:$0xff]
  %v30 = vld [vmem:[%s0 + $0x20] sm:$0xff]
  %v31 = vld [vmem:[%s0 + $0x28] sm:$0xff]
  %v32 = vld [vmem:[%s0 + $0x30] sm:$0xff]
  %v33 = vld [vmem:[%s0 + $0x38] sm:$0xff]
  %v34 = vld [vmem:[%s0 + $0x40] sm:$0xff]
  %v35 = vld [vmem:[%s0 + $0x48] sm:$0xff]
  %v36 = vld [vmem:[%s0 + $0x50] sm:$0xff]
  %v37 = vld [vmem:[%s0 + $0x58] sm:$0xff]
  %v38 = vld [vmem:[%s0 + $0x60] sm:$0xff]
  %v39 = vld [vmem:[%s0 + $0x68] sm:$0xff]
  %v40 = vld [vmem:[%s0 + $0x70] sm:$0xff]
  %v41 = vld [vmem:[%s0 + $0x78] sm:$0xff]
  %v59 = vrot.slane 0.0, 7
  %v60 = vrot.slane %v26, 7
  %v61 = vrot.slane %v27, 7
  %v62 = vrot.slane %v28, 7
  %v63 = vrot.slane %v29, 7
  %v64 = vrot.slane %v30, 7
  %v65 = vrot.slane %v31, 7
  %v66 = vrot.slane %v32, 7
  %v67 = vrot.slane %v33, 7
  %v68 = vrot.slane %v34, 7
  %v69 = vrot.slane %v35, 7
  %v70 = vrot.slane %v36, 7
  %v71 = vrot.slane %v37, 7
  %v72 = vrot.slane %v38, 7
  %v73 = vrot.slane %v39, 7
  %v74 = vrot.slane %v40, 7
  %v75 = vrot.slane %v41, 7
  %vm93 = vcmask 1040384
  %v94 = vsel %vm93, 0.0, %v59
  %v95 = vsel %vm93, 0.0, %v60
  %v96 = vsel %vm93, 0.0, %v61
  %v97 = vsel %vm93, 0.0, %v62
  %v98 = vsel %vm93, 0.0, %v63
  %v99 = vsel %vm93, 0.0, %v64
  %v100 = vsel %vm93, 0.0, %v65
  %v101 = vsel %vm93, 0.0, %v66
  %v102 = vsel %vm93, 0.0, %v67
  %v103 = vsel %vm93, 0.0, %v68
  %v104 = vsel %vm93, 0.0, %v69
  %v105 = vsel %vm93, 0.0, %v70
  %v106 = vsel %vm93, 0.0, %v71
  %v107 = vsel %vm93, 0.0, %v72
  %v108 = vsel %vm93, 0.0, %v73
  %v109 = vsel %vm93, 0.0, %v74
  %v110 = vsel %vm93, 0.0, %v75
  %v111 = vsel %vm93, %v59, 0.0
  %v112 = vsel %vm93, %v60, 0.0
  %v113 = vsel %vm93, %v61, 0.0
  %v114 = vsel %vm93, %v62, 0.0
  %v115 = vsel %vm93, %v63, 0.0
  %v116 = vsel %vm93, %v64, 0.0
  %v117 = vsel %vm93, %v65, 0.0
  %v118 = vsel %vm93, %v66, 0.0
  %v119 = vsel %vm93, %v67, 0.0
  %v120 = vsel %vm93, %v68, 0.0
  %v121 = vsel %vm93, %v69, 0.0
  %v122 = vsel %vm93, %v70, 0.0
  %v123 = vsel %vm93, %v71, 0.0
  %v124 = vsel %vm93, %v72, 0.0
  %v125 = vsel %vm93, %v73, 0.0
  %v126 = vsel %vm93, %v74, 0.0
  %v127 = vsel %vm93, %v75, 0.0
  %vm158 = vcmask 1046528
  %v159 = vrot.slane %v94, 1
  %v160 = vrot.slane %v111, 1
  %v161 = vsel %vm158, %v159, %v160
  %v162 = vrot.slane %v95, 1
  %v163 = vrot.slane %v112, 1
  %v164 = vsel %vm158, %v162, %v163
  %v165 = vrot.slane %v96, 1
  %v166 = vrot.slane %v113, 1
  %v167 = vsel %vm158, %v165, %v166
  %v168 = vrot.slane %v97, 1
  %v169 = vrot.slane %v114, 1
  %v170 = vsel %vm158, %v168, %v169
  %v171 = vrot.slane %v98, 1
  %v172 = vrot.slane %v115, 1
  %v173 = vsel %vm158, %v171, %v172
  %v174 = vrot.slane %v99, 1
  %v175 = vrot.slane %v116, 1
  %v176 = vsel %vm158, %v174, %v175
  %v177 = vrot.slane %v100, 1
  %v178 = vrot.slane %v117, 1
  %v179 = vsel %vm158, %v177, %v178
  %v180 = vrot.slane %v101, 1
  %v181 = vrot.slane %v118, 1
  %v182 = vsel %vm158, %v180, %v181
  %v183 = vrot.slane %v103, 1
  %v184 = vrot.slane %v120, 1
  %v185 = vsel %vm158, %v183, %v184
  %v186 = vrot.slane %v104, 1
  %v187 = vrot.slane %v121, 1
  %v188 = vsel %vm158, %v186, %v187
  %v189 = vrot.slane %v105, 1
  %v190 = vrot.slane %v122, 1
  %v191 = vsel %vm158, %v189, %v190
  %v192 = vrot.slane %v106, 1
  %v193 = vrot.slane %v123, 1
  %v194 = vsel %vm158, %v192, %v193
  %v195 = vrot.slane %v107, 1
  %v196 = vrot.slane %v124, 1
  %v197 = vsel %vm158, %v195, %v196
  %v198 = vrot.slane %v108, 1
  %v199 = vrot.slane %v125, 1
  %v200 = vsel %vm158, %v198, %v199
  %v201 = vrot.slane %v109, 1
  %v202 = vrot.slane %v126, 1
  %v203 = vsel %vm158, %v201, %v202
  %vm204 = vcmask 1045504
  %v205 = vrot.slane %v94, 2
  %v206 = vrot.slane %v111, 2
  %v207 = vsel %vm204, %v205, %v206
  %v208 = vrot.slane %v95, 2
  %v209 = vrot.slane %v112, 2
  %v210 = vsel %vm204, %v208, %v209
  %v211 = vrot.slane %v96, 2
  %v212 = vrot.slane %v113, 2
  %v213 = vsel %vm204, %v211, %v212
  %v214 = vrot.slane %v97, 2
  %v215 = vrot.slane %v114, 2
  %v216 = vsel %vm204, %v214, %v215
  %v217 = vrot.slane %v98, 2
  %v218 = vrot.slane %v115, 2
  %v219 = vsel %vm204, %v217, %v218
  %v220 = vrot.slane %v99, 2
  %v221 = vrot.slane %v116, 2
  %v222 = vsel %vm204, %v220, %v221
  %v223 = vrot.slane %v100, 2
  %v224 = vrot.slane %v117, 2
  %v225 = vsel %vm204, %v223, %v224
  %v226 = vrot.slane %v101, 2
  %v227 = vrot.slane %v118, 2
  %v228 = vsel %vm204, %v226, %v227
  %v229 = vrot.slane %v103, 2
  %v230 = vrot.slane %v120, 2
  %v231 = vsel %vm204, %v229, %v230
  %v232 = vrot.slane %v104, 2
  %v233 = vrot.slane %v121, 2
  %v234 = vsel %vm204, %v232, %v233
  %v235 = vrot.slane %v105, 2
  %v236 = vrot.slane %v122, 2
  %v237 = vsel %vm204, %v235, %v236
  %v238 = vrot.slane %v106, 2
  %v239 = vrot.slane %v123, 2
  %v240 = vsel %vm204, %v238, %v239
  %v241 = vrot.slane %v107, 2
  %v242 = vrot.slane %v124, 2
  %v243 = vsel %vm204, %v241, %v242
  %v244 = vrot.slane %v108, 2
  %v245 = vrot.slane %v125, 2
  %v246 = vsel %vm204, %v244, %v245
  %v247 = vrot.slane %v109, 2
  %v248 = vrot.slane %v126, 2
  %v249 = vsel %vm204, %v247, %v248
  %v254 = vrot.slane %v102, 1
  %v255 = vrot.slane %v119, 1
  %v256 = vsel %vm158, %v254, %v255
  %v257 = vrot.slane %v110, 1
  %v258 = vrot.slane %v127, 1
  %v259 = vsel %vm158, %v257, %v258
  %v260 = vrot.slane %v102, 2
  %v261 = vrot.slane %v119, 2
  %v262 = vsel %vm204, %v260, %v261
  %v263 = vrot.slane %v110, 2
  %v264 = vrot.slane %v127, 2
  %v265 = vsel %vm204, %v263, %v264
  %266 = vrot.lane.b32.xlu0 %v161, 16
  %v267 = vpop.permute.xlu0 %266
  %268 = vrot.lane.b32.xlu0 %v164, 16
  %v269 = vpop.permute.xlu0 %268
  %270 = vrot.lane.b32.xlu0 %v167, 16
  %v271 = vpop.permute.xlu0 %270
  %272 = vrot.lane.b32.xlu0 %v170, 16
  %v273 = vpop.permute.xlu0 %272
  %274 = vrot.lane.b32.xlu0 %v173, 16
  %v275 = vpop.permute.xlu0 %274
  %276 = vrot.lane.b32.xlu0 %v176, 16
  %v277 = vpop.permute.xlu0 %276
  %278 = vrot.lane.b32.xlu0 %v179, 16
  %v279 = vpop.permute.xlu0 %278
  %280 = vrot.lane.b32.xlu0 %v182, 16
  %v281 = vpop.permute.xlu0 %280
  %282 = vrot.lane.b32.xlu0 %v185, 16
  %v283 = vpop.permute.xlu0 %282
  %284 = vrot.lane.b32.xlu0 %v188, 16
  %v285 = vpop.permute.xlu0 %284
  %286 = vrot.lane.b32.xlu0 %v191, 16
  %v287 = vpop.permute.xlu0 %286
  %288 = vrot.lane.b32.xlu0 %v194, 16
  %v289 = vpop.permute.xlu0 %288
  %290 = vrot.lane.b32.xlu0 %v197, 16
  %v291 = vpop.permute.xlu0 %290
  %292 = vrot.lane.b32.xlu0 %v200, 16
  %v293 = vpop.permute.xlu0 %292
  %294 = vrot.lane.b32.xlu0 %v203, 16
  %v295 = vpop.permute.xlu0 %294
  %311 = vrot.lane.b32.xlu0 %v207, 32
  %v312 = vpop.permute.xlu0 %311
  %313 = vrot.lane.b32.xlu0 %v210, 32
  %v314 = vpop.permute.xlu0 %313
  %315 = vrot.lane.b32.xlu0 %v213, 32
  %v316 = vpop.permute.xlu0 %315
  %317 = vrot.lane.b32.xlu0 %v216, 32
  %v318 = vpop.permute.xlu0 %317
  %319 = vrot.lane.b32.xlu0 %v219, 32
  %v320 = vpop.permute.xlu0 %319
  %321 = vrot.lane.b32.xlu0 %v222, 32
  %v322 = vpop.permute.xlu0 %321
  %323 = vrot.lane.b32.xlu0 %v225, 32
  %v324 = vpop.permute.xlu0 %323
  %325 = vrot.lane.b32.xlu0 %v228, 32
  %v326 = vpop.permute.xlu0 %325
  %327 = vrot.lane.b32.xlu0 %v231, 32
  %v328 = vpop.permute.xlu0 %327
  %329 = vrot.lane.b32.xlu0 %v234, 32
  %v330 = vpop.permute.xlu0 %329
  %331 = vrot.lane.b32.xlu0 %v237, 32
  %v332 = vpop.permute.xlu0 %331
  %333 = vrot.lane.b32.xlu0 %v240, 32
  %v334 = vpop.permute.xlu0 %333
  %335 = vrot.lane.b32.xlu0 %v243, 32
  %v336 = vpop.permute.xlu0 %335
  %337 = vrot.lane.b32.xlu0 %v246, 32
  %v338 = vpop.permute.xlu0 %337
  %339 = vrot.lane.b32.xlu0 %v249, 32
  %v340 = vpop.permute.xlu0 %339
  %356 = vrot.lane.b32.xlu0 %v95, 48
  %v357 = vpop.permute.xlu0 %356
  %358 = vrot.lane.b32.xlu0 %v96, 48
  %v359 = vpop.permute.xlu0 %358
  %360 = vrot.lane.b32.xlu0 %v97, 48
  %v361 = vpop.permute.xlu0 %360
  %362 = vrot.lane.b32.xlu0 %v98, 48
  %v363 = vpop.permute.xlu0 %362
  %364 = vrot.lane.b32.xlu0 %v99, 48
  %v365 = vpop.permute.xlu0 %364
  %366 = vrot.lane.b32.xlu0 %v100, 48
  %v367 = vpop.permute.xlu0 %366
  %368 = vrot.lane.b32.xlu0 %v101, 48
  %v369 = vpop.permute.xlu0 %368
  %370 = vrot.lane.b32.xlu0 %v102, 48
  %v371 = vpop.permute.xlu0 %370
  %372 = vrot.lane.b32.xlu0 %v103, 48
  %v373 = vpop.permute.xlu0 %372
  %374 = vrot.lane.b32.xlu0 %v104, 48
  %v375 = vpop.permute.xlu0 %374
  %376 = vrot.lane.b32.xlu0 %v105, 48
  %v377 = vpop.permute.xlu0 %376
  %378 = vrot.lane.b32.xlu0 %v106, 48
  %v379 = vpop.permute.xlu0 %378
  %380 = vrot.lane.b32.xlu0 %v107, 48
  %v381 = vpop.permute.xlu0 %380
  %382 = vrot.lane.b32.xlu0 %v108, 48
  %v383 = vpop.permute.xlu0 %382
  %384 = vrot.lane.b32.xlu0 %v109, 48
  %v385 = vpop.permute.xlu0 %384
  %386 = vrot.lane.b32.xlu0 %v110, 48
  %v387 = vpop.permute.xlu0 %386
  %404 = vrot.lane.b32.xlu0 %v164, 64
  %v405 = vpop.permute.xlu0 %404
  %406 = vrot.lane.b32.xlu0 %v167, 64
  %v407 = vpop.permute.xlu0 %406
  %408 = vrot.lane.b32.xlu0 %v170, 64
  %v409 = vpop.permute.xlu0 %408
  %410 = vrot.lane.b32.xlu0 %v173, 64
  %v411 = vpop.permute.xlu0 %410
  %412 = vrot.lane.b32.xlu0 %v176, 64
  %v413 = vpop.permute.xlu0 %412
  %414 = vrot.lane.b32.xlu0 %v179, 64
  %v415 = vpop.permute.xlu0 %414
  %416 = vrot.lane.b32.xlu0 %v182, 64
  %v417 = vpop.permute.xlu0 %416
  %418 = vrot.lane.b32.xlu0 %v256, 64
  %v419 = vpop.permute.xlu0 %418
  %420 = vrot.lane.b32.xlu0 %v185, 64
  %v421 = vpop.permute.xlu0 %420
  %422 = vrot.lane.b32.xlu0 %v188, 64
  %v423 = vpop.permute.xlu0 %422
  %424 = vrot.lane.b32.xlu0 %v191, 64
  %v425 = vpop.permute.xlu0 %424
  %426 = vrot.lane.b32.xlu0 %v194, 64
  %v427 = vpop.permute.xlu0 %426
  %428 = vrot.lane.b32.xlu0 %v197, 64
  %v429 = vpop.permute.xlu0 %428
  %430 = vrot.lane.b32.xlu0 %v200, 64
  %v431 = vpop.permute.xlu0 %430
  %432 = vrot.lane.b32.xlu0 %v203, 64
  %v433 = vpop.permute.xlu0 %432
  %434 = vrot.lane.b32.xlu0 %v259, 64
  %v435 = vpop.permute.xlu0 %434
  %452 = vrot.lane.b32.xlu0 %v210, 80
  %v453 = vpop.permute.xlu0 %452
  %454 = vrot.lane.b32.xlu0 %v213, 80
  %v455 = vpop.permute.xlu0 %454
  %456 = vrot.lane.b32.xlu0 %v216, 80
  %v457 = vpop.permute.xlu0 %456
  %458 = vrot.lane.b32.xlu0 %v219, 80
  %v459 = vpop.permute.xlu0 %458
  %460 = vrot.lane.b32.xlu0 %v222, 80
  %v461 = vpop.permute.xlu0 %460
  %462 = vrot.lane.b32.xlu0 %v225, 80
  %v463 = vpop.permute.xlu0 %462
  %464 = vrot.lane.b32.xlu0 %v228, 80
  %v465 = vpop.permute.xlu0 %464
  %466 = vrot.lane.b32.xlu0 %v262, 80
  %v467 = vpop.permute.xlu0 %466
  %468 = vrot.lane.b32.xlu0 %v231, 80
  %v469 = vpop.permute.xlu0 %468
  %470 = vrot.lane.b32.xlu0 %v234, 80
  %v471 = vpop.permute.xlu0 %470
  %472 = vrot.lane.b32.xlu0 %v237, 80
  %v473 = vpop.permute.xlu0 %472
  %474 = vrot.lane.b32.xlu0 %v240, 80
  %v475 = vpop.permute.xlu0 %474
  %476 = vrot.lane.b32.xlu0 %v243, 80
  %v477 = vpop.permute.xlu0 %476
  %478 = vrot.lane.b32.xlu0 %v246, 80
  %v479 = vpop.permute.xlu0 %478
  %480 = vrot.lane.b32.xlu0 %v249, 80
  %v481 = vpop.permute.xlu0 %480
  %482 = vrot.lane.b32.xlu0 %v265, 80
  %v483 = vpop.permute.xlu0 %482
  %500 = vrot.lane.b32.xlu0 %v96, 96
  %v501 = vpop.permute.xlu0 %500
  %502 = vrot.lane.b32.xlu0 %v97, 96
  %v503 = vpop.permute.xlu0 %502
  %504 = vrot.lane.b32.xlu0 %v98, 96
  %v505 = vpop.permute.xlu0 %504
  %506 = vrot.lane.b32.xlu0 %v99, 96
  %v507 = vpop.permute.xlu0 %506
  %508 = vrot.lane.b32.xlu0 %v100, 96
  %v509 = vpop.permute.xlu0 %508
  %510 = vrot.lane.b32.xlu0 %v101, 96
  %v511 = vpop.permute.xlu0 %510
  %512 = vrot.lane.b32.xlu0 %v102, 96
  %v513 = vpop.permute.xlu0 %512
  %514 = vrot.lane.b32.xlu0 %v94, 96
  %v515 = vpop.permute.xlu0 %514
  %516 = vrot.lane.b32.xlu0 %v104, 96
  %v517 = vpop.permute.xlu0 %516
  %518 = vrot.lane.b32.xlu0 %v105, 96
  %v519 = vpop.permute.xlu0 %518
  %520 = vrot.lane.b32.xlu0 %v106, 96
  %v521 = vpop.permute.xlu0 %520
  %522 = vrot.lane.b32.xlu0 %v107, 96
  %v523 = vpop.permute.xlu0 %522
  %524 = vrot.lane.b32.xlu0 %v108, 96
  %v525 = vpop.permute.xlu0 %524
  %526 = vrot.lane.b32.xlu0 %v109, 96
  %v527 = vpop.permute.xlu0 %526
  %528 = vrot.lane.b32.xlu0 %v110, 96
  %v529 = vpop.permute.xlu0 %528
  %545 = vrot.lane.b32.xlu0 %v167, 112
  %v546 = vpop.permute.xlu0 %545
  %547 = vrot.lane.b32.xlu0 %v170, 112
  %v548 = vpop.permute.xlu0 %547
  %549 = vrot.lane.b32.xlu0 %v173, 112
  %v550 = vpop.permute.xlu0 %549
  %551 = vrot.lane.b32.xlu0 %v176, 112
  %v552 = vpop.permute.xlu0 %551
  %553 = vrot.lane.b32.xlu0 %v179, 112
  %v554 = vpop.permute.xlu0 %553
  %555 = vrot.lane.b32.xlu0 %v182, 112
  %v556 = vpop.permute.xlu0 %555
  %557 = vrot.lane.b32.xlu0 %v256, 112
  %v558 = vpop.permute.xlu0 %557
  %559 = vrot.lane.b32.xlu0 %v161, 112
  %v560 = vpop.permute.xlu0 %559
  %561 = vrot.lane.b32.xlu0 %v188, 112
  %v562 = vpop.permute.xlu0 %561
  %563 = vrot.lane.b32.xlu0 %v191, 112
  %v564 = vpop.permute.xlu0 %563
  %565 = vrot.lane.b32.xlu0 %v194, 112
  %v566 = vpop.permute.xlu0 %565
  %567 = vrot.lane.b32.xlu0 %v197, 112
  %v568 = vpop.permute.xlu0 %567
  %569 = vrot.lane.b32.xlu0 %v200, 112
  %v570 = vpop.permute.xlu0 %569
  %571 = vrot.lane.b32.xlu0 %v203, 112
  %v572 = vpop.permute.xlu0 %571
  %573 = vrot.lane.b32.xlu0 %v259, 112
  %v574 = vpop.permute.xlu0 %573
  %vm590 = vcmask 130048
  %v591 = vsel %vm590, %v94, %v267
  %v592 = vsel %vm590, %v95, %v269
  %v593 = vsel %vm590, %v96, %v271
  %v594 = vsel %vm590, %v97, %v273
  %v595 = vsel %vm590, %v98, %v275
  %v596 = vsel %vm590, %v99, %v277
  %v597 = vsel %vm590, %v100, %v279
  %v598 = vsel %vm590, %v101, %v281
  %v599 = vsel %vm590, %v103, %v283
  %v600 = vsel %vm590, %v104, %v285
  %v601 = vsel %vm590, %v105, %v287
  %v602 = vsel %vm590, %v106, %v289
  %v603 = vsel %vm590, %v107, %v291
  %v604 = vsel %vm590, %v108, %v293
  %v605 = vsel %vm590, %v109, %v295
  %vm606 = vcmask 261120
  %v607 = vsel %vm606, %v591, %v312
  %v608 = vsel %vm606, %v592, %v314
  %v609 = vsel %vm606, %v593, %v316
  %v610 = vsel %vm606, %v594, %v318
  %v611 = vsel %vm606, %v595, %v320
  %v612 = vsel %vm606, %v596, %v322
  %v613 = vsel %vm606, %v597, %v324
  %v614 = vsel %vm606, %v598, %v326
  %v615 = vsel %vm606, %v599, %v328
  %v616 = vsel %vm606, %v600, %v330
  %v617 = vsel %vm606, %v601, %v332
  %v618 = vsel %vm606, %v602, %v334
  %v619 = vsel %vm606, %v603, %v336
  %v620 = vsel %vm606, %v604, %v338
  %v621 = vsel %vm606, %v605, %v340
  %vm622 = vcmask 392192
  %v623 = vsel %vm622, %v607, %v357
  %v624 = vsel %vm622, %v608, %v359
  %v625 = vsel %vm622, %v609, %v361
  %v626 = vsel %vm622, %v610, %v363
  %v627 = vsel %vm622, %v611, %v365
  %v628 = vsel %vm622, %v612, %v367
  %v629 = vsel %vm622, %v613, %v369
  %v630 = vsel %vm622, %v614, %v371
  %v631 = vsel %vm622, %v607, %v373
  %v632 = vsel %vm622, %v615, %v375
  %v633 = vsel %vm622, %v616, %v377
  %v634 = vsel %vm622, %v617, %v379
  %v635 = vsel %vm622, %v618, %v381
  %v636 = vsel %vm622, %v619, %v383
  %v637 = vsel %vm622, %v620, %v385
  %v638 = vsel %vm622, %v621, %v387
  %vm639 = vcmask 523264
  %v640 = vsel %vm639, %v623, %v405
  %v641 = vsel %vm639, %v624, %v407
  %v642 = vsel %vm639, %v625, %v409
  %v643 = vsel %vm639, %v626, %v411
  %v644 = vsel %vm639, %v627, %v413
  %v645 = vsel %vm639, %v628, %v415
  %v646 = vsel %vm639, %v629, %v417
  %v647 = vsel %vm639, %v630, %v419
  %v648 = vsel %vm639, %v631, %v421
  %v649 = vsel %vm639, %v632, %v423
  %v650 = vsel %vm639, %v633, %v425
  %v651 = vsel %vm639, %v634, %v427
  %v652 = vsel %vm639, %v635, %v429
  %v653 = vsel %vm639, %v636, %v431
  %v654 = vsel %vm639, %v637, %v433
  %v655 = vsel %vm639, %v638, %v435
  %vm656 = vcmask 654336
  %v657 = vsel %vm656, %v640, %v453
  %v658 = vsel %vm656, %v641, %v455
  %v659 = vsel %vm656, %v642, %v457
  %v660 = vsel %vm656, %v643, %v459
  %v661 = vsel %vm656, %v644, %v461
  %v662 = vsel %vm656, %v645, %v463
  %v663 = vsel %vm656, %v646, %v465
  %v664 = vsel %vm656, %v647, %v467
  %v665 = vsel %vm656, %v648, %v469
  %v666 = vsel %vm656, %v649, %v471
  %v667 = vsel %vm656, %v650, %v473
  %v668 = vsel %vm656, %v651, %v475
  %v669 = vsel %vm656, %v652, %v477
  %v670 = vsel %vm656, %v653, %v479
  %v671 = vsel %vm656, %v654, %v481
  %v672 = vsel %vm656, %v655, %v483
  %vm673 = vcmask 785408
  %v674 = vsel %vm673, %v657, %v501
  %v675 = vsel %vm673, %v658, %v503
  %v676 = vsel %vm673, %v659, %v505
  %v677 = vsel %vm673, %v660, %v507
  %v678 = vsel %vm673, %v661, %v509
  %v679 = vsel %vm673, %v662, %v511
  %v680 = vsel %vm673, %v663, %v513
  %v681 = vsel %vm673, %v664, %v515
  %v682 = vsel %vm673, %v665, %v517
  %v683 = vsel %vm673, %v666, %v519
  %v684 = vsel %vm673, %v667, %v521
  %v685 = vsel %vm673, %v668, %v523
  %v686 = vsel %vm673, %v669, %v525
  %v687 = vsel %vm673, %v670, %v527
  %v688 = vsel %vm673, %v671, %v529
  %v689 = vsel %vm673, %v672, %v515
  %vm690 = vcmask 916480
  %v691 = vsel %vm690, %v674, %v546
  %v692 = vsel %vm690, %v675, %v548
  %v693 = vsel %vm690, %v676, %v550
  %v694 = vsel %vm690, %v677, %v552
  %v695 = vsel %vm690, %v678, %v554
  %v696 = vsel %vm690, %v679, %v556
  %v697 = vsel %vm690, %v680, %v558
  %v698 = vsel %vm690, %v681, %v560
  %v699 = vsel %vm690, %v682, %v562
  %v700 = vsel %vm690, %v683, %v564
  %v701 = vsel %vm690, %v684, %v566
  %v702 = vsel %vm690, %v685, %v568
  %v703 = vsel %vm690, %v686, %v570
  %v704 = vsel %vm690, %v687, %v572
  %v705 = vsel %vm690, %v688, %v574
  %v706 = vsel %vm690, %v689, %v560
  %v707 = vld [vmem:[%s1] sm:$0xff]
  %v708 = vld [vmem:[%s1 + $0x8] sm:$0xff]
  %v709 = vld [vmem:[%s1 + $0x10] sm:$0xff]
  %v710 = vld [vmem:[%s1 + $0x18] sm:$0xff]
  %v711 = vld [vmem:[%s1 + $0x20] sm:$0xff]
  %v712 = vld [vmem:[%s1 + $0x28] sm:$0xff]
  %v713 = vld [vmem:[%s1 + $0x30] sm:$0xff]
  %v714 = vld [vmem:[%s1 + $0x38] sm:$0xff]
  %v715 = vld [vmem:[%s1 + $0x40] sm:$0xff]
  %v716 = vld [vmem:[%s1 + $0x48] sm:$0xff]
  %v717 = vld [vmem:[%s1 + $0x50] sm:$0xff]
  %v718 = vld [vmem:[%s1 + $0x58] sm:$0xff]
  %v719 = vld [vmem:[%s1 + $0x60] sm:$0xff]
  %v720 = vld [vmem:[%s1 + $0x68] sm:$0xff]
  %v721 = vld [vmem:[%s1 + $0x70] sm:$0xff]
  %v722 = vld [vmem:[%s1 + $0x78] sm:$0xff]
  %v723 = vld [vmem:[%s1 + $0x80] sm:$0xff]
  %v724 = vld [vmem:[%s1 + $0x88] sm:$0xff]
  %v725 = vsel %vm590, %v213, 0
  %v727 = vsel %vm590, %v216, 0
  %v729 = vsel %vm590, %v219, 0
  %v731 = vsel %vm590, %v222, 0
  %v733 = vsel %vm590, %v225, 0
  %v735 = vsel %vm590, %v228, 0
  %v737 = vsel %vm590, %v262, 0
  %v739 = vsel %vm590, %v207, 0
  %v741 = vsel %vm590, %v234, 0
  %v743 = vsel %vm590, %v237, 0
  %v745 = vsel %vm590, %v240, 0
  %v747 = vsel %vm590, %v243, 0
  %v749 = vsel %vm590, %v246, 0
  %v751 = vsel %vm590, %v249, 0
  %v753 = vsel %vm590, %v265, 0
  %755 = vmatprep.subr.mxu0 0.0
  %756 = vmatpush1.msra.mxu0 %v722
  %757 = vmatprep.subr.mxu0 0.0
  %758 = vmatpush1.msra.mxu0 %v721
  %759 = vmatprep.subr.mxu0 0.0
  %760 = vmatpush1.msra.mxu0 %v720
  %761 = vmatprep.subr.mxu0 0.0
  %762 = vmatpush1.msra.mxu0 %v719
  %763 = vmatprep.subr.mxu0 0.0
  %764 = vmatpush1.msra.mxu0 %v718
  %765 = vmatprep.subr.mxu0 0.0
  %766 = vmatpush1.msra.mxu0 %v717
  %767 = vmatprep.subr.mxu0 0.0
  %768 = vmatpush1.msra.mxu0 %v716
  %769 = vmatprep.subr.mxu0 0.0
  %770 = vmatpush1.msra.mxu0 %v715
  %771 = vmatprep.subr.mxu0 0.0
  %772 = vmatpush1.msra.mxu0 %v714
  %773 = vmatprep.subr.mxu0 0.0
  %774 = vmatpush1.msra.mxu0 %v713
  %775 = vmatprep.subr.mxu0 0.0
  %776 = vmatpush1.msra.mxu0 %v712
  %777 = vmatprep.subr.mxu0 0.0
  %778 = vmatpush1.msra.mxu0 %v711
  %779 = vmatprep.subr.mxu0 0.0
  %780 = vmatpush1.msra.mxu0 %v710
  %781 = vmatprep.subr.mxu0 0.0
  %782 = vmatpush1.msra.mxu0 %v709
  %783 = vmatprep.subr.mxu0 0.0
  %784 = vmatpush1.msra.mxu0 %v708
  %785 = vmatprep.subr.mxu0 0.0
  %786 = vmatpush1.msra.mxu0 %v707
  %787 = vmatprep.subr.mxu0 0.0
  %788 = vmatpush2.msra.mxu0 0.0
  %789 = vmatprep.subr.mxu0 0.0
  %790 = vmatpush2.msra.mxu0 0.0
  %791 = vmatprep.subr.mxu0 0.0
  %792 = vmatpush2.msra.mxu0 0.0
  %793 = vmatprep.subr.mxu0 0.0
  %794 = vmatpush2.msra.mxu0 0.0
  %795 = vmatprep.subr.mxu0 0.0
  %796 = vmatpush2.msra.mxu0 0.0
  %797 = vmatprep.subr.mxu0 0.0
  %798 = vmatpush2.msra.mxu0 0.0
  %799 = vmatprep.subr.mxu0 0.0
  %800 = vmatpush2.msra.mxu0 0.0
  %801 = vmatprep.subr.mxu0 0.0
  %802 = vmatpush2.msra.mxu0 0.0
  %803 = vmatprep.subr.mxu0 0.0
  %804 = vmatpush2.msra.mxu0 0.0
  %805 = vmatprep.subr.mxu0 0.0
  %806 = vmatpush2.msra.mxu0 0.0
  %807 = vmatprep.subr.mxu0 0.0
  %808 = vmatpush2.msra.mxu0 0.0
  %809 = vmatprep.subr.mxu0 0.0
  %810 = vmatpush2.msra.mxu0 0.0
  %811 = vmatprep.subr.mxu0 0.0
  %812 = vmatpush2.msra.mxu0 0.0
  %813 = vmatprep.subr.mxu0 0.0
  %814 = vmatpush2.msra.mxu0 0.0
  %815 = vmatprep.subr.mxu0 0.0
  %816 = vmatpush2.msra.mxu0 %v724
  %817 = vmatprep.subr.mxu0 0.0
  %818 = vmatpush2.msra.mxu0 %v723
  %819 = vmatprep.mubr.f32.mxu0 %v725
  %820 = vmatmul.mubr.f32.gmra.mxu0 %v691
  %v821 = vpop.f32.mrf.mxu0
  %v822 = vadd.f32 0.0, %v821
  %v823 = vpop.f32.mrf.mxu0
  %824 = vmatprep.mubr.f32.mxu0 %v727
  %825 = vmatmul.mubr.f32.gmra.mxu0 %v692
  %v826 = vpop.f32.mrf.mxu0
  %v827 = vadd.f32 0.0, %v826
  %v828 = vpop.f32.mrf.mxu0
  %829 = vmatprep.mubr.f32.mxu0 %v729
  %830 = vmatmul.mubr.f32.gmra.mxu0 %v693
  %v831 = vpop.f32.mrf.mxu0
  %v832 = vadd.f32 0.0, %v831
  %v833 = vpop.f32.mrf.mxu0
  %834 = vmatprep.mubr.f32.mxu0 %v731
  %835 = vmatmul.mubr.f32.gmra.mxu0 %v694
  %v836 = vpop.f32.mrf.mxu0
  %v837 = vadd.f32 0.0, %v836
  %v838 = vpop.f32.mrf.mxu0
  %839 = vmatprep.mubr.f32.mxu0 %v733
  %840 = vmatmul.mubr.f32.gmra.mxu0 %v695
  %v841 = vpop.f32.mrf.mxu0
  %v842 = vadd.f32 0.0, %v841
  %v843 = vpop.f32.mrf.mxu0
  %844 = vmatprep.mubr.f32.mxu0 %v735
  %845 = vmatmul.mubr.f32.gmra.mxu0 %v696
  %v846 = vpop.f32.mrf.mxu0
  %v847 = vadd.f32 0.0, %v846
  %v848 = vpop.f32.mrf.mxu0
  %849 = vmatprep.mubr.f32.mxu0 %v737
  %850 = vmatmul.mubr.f32.gmra.mxu0 %v697
  %v851 = vpop.f32.mrf.mxu0
  %v852 = vadd.f32 0.0, %v851
  %v853 = vpop.f32.mrf.mxu0
  %854 = vmatprep.mubr.f32.mxu0 %v739
  %855 = vmatmul.mubr.f32.gmra.mxu0 %v698
  %v856 = vpop.f32.mrf.mxu0
  %v857 = vadd.f32 0.0, %v856
  %v858 = vpop.f32.mrf.mxu0
  %859 = vmatprep.mubr.f32.mxu0 %v741
  %860 = vmatmul.mubr.f32.gmra.mxu0 %v699
  %v861 = vpop.f32.mrf.mxu0
  %v862 = vadd.f32 0.0, %v861
  %v863 = vpop.f32.mrf.mxu0
  %864 = vmatprep.mubr.f32.mxu0 %v743
  %865 = vmatmul.mubr.f32.gmra.mxu0 %v700
  %v866 = vpop.f32.mrf.mxu0
  %v867 = vadd.f32 0.0, %v866
  %v868 = vpop.f32.mrf.mxu0
  %869 = vmatprep.mubr.f32.mxu0 %v745
  %870 = vmatmul.mubr.f32.gmra.mxu0 %v701
  %v871 = vpop.f32.mrf.mxu0
  %v872 = vadd.f32 0.0, %v871
  %v873 = vpop.f32.mrf.mxu0
  %874 = vmatprep.mubr.f32.mxu0 %v747
  %875 = vmatmul.mubr.f32.gmra.mxu0 %v702
  %v876 = vpop.f32.mrf.mxu0
  %v877 = vadd.f32 0.0, %v876
  %v878 = vpop.f32.mrf.mxu0
  %879 = vmatprep.mubr.f32.mxu0 %v749
  %880 = vmatmul.mubr.f32.gmra.mxu0 %v703
  %v881 = vpop.f32.mrf.mxu0
  %v882 = vadd.f32 0.0, %v881
  %v883 = vpop.f32.mrf.mxu0
  %884 = vmatprep.mubr.f32.mxu0 %v751
  %885 = vmatmul.mubr.f32.gmra.mxu0 %v704
  %v886 = vpop.f32.mrf.mxu0
  %v887 = vadd.f32 0.0, %v886
  %v888 = vpop.f32.mrf.mxu0
  %889 = vmatprep.mubr.f32.mxu0 %v753
  %890 = vmatmul.mubr.f32.gmra.mxu0 %v705
  %v891 = vpop.f32.mrf.mxu0
  %v892 = vadd.f32 0.0, %v891
  %v893 = vpop.f32.mrf.mxu0
  %894 = vmatprep.mubr.f32.mxu0 %v739
  %895 = vmatmul.mubr.f32.gmra.mxu0 %v706
  %v896 = vpop.f32.mrf.mxu0
  %v897 = vadd.f32 0.0, %v896
  %v898 = vpop.f32.mrf.mxu0
  %899 = vdwg.mxu0
  %vm900 = vcmask 64512
  %v901 = vsel %vm900, %v822, 0.0
  %v902 = vsel %vm900, %v827, 0.0
  %v903 = vadd.f32 %v901, %v902
  %v904 = vsel %vm900, %v832, 0.0
  %v905 = vadd.f32 %v903, %v904
  %v906 = vsel %vm900, %v837, 0.0
  %v907 = vadd.f32 %v905, %v906
  %v908 = vsel %vm900, %v842, 0.0
  %v909 = vadd.f32 %v907, %v908
  %v910 = vsel %vm900, %v847, 0.0
  %v911 = vadd.f32 %v909, %v910
  %v912 = vsel %vm900, %v852, 0.0
  %v913 = vadd.f32 %v911, %v912
  %v914 = vsel %vm900, %v857, 0.0
  %v915 = vadd.f32 %v913, %v914
  %v916 = vsel %vm900, %v862, 0.0
  %v917 = vadd.f32 %v915, %v916
  %v918 = vsel %vm900, %v867, 0.0
  %v919 = vadd.f32 %v917, %v918
  %v920 = vsel %vm900, %v872, 0.0
  %v921 = vadd.f32 %v919, %v920
  %v922 = vsel %vm900, %v877, 0.0
  %v923 = vadd.f32 %v921, %v922
  %v924 = vsel %vm900, %v882, 0.0
  %v925 = vadd.f32 %v923, %v924
  %v926 = vsel %vm900, %v887, 0.0
  %v927 = vadd.f32 %v925, %v926
  %v928 = vsel %vm900, %v892, 0.0
  %v929 = vadd.f32 %v927, %v928
  %v930 = vsel %vm900, %v897, 0.0
  %v931 = vadd.f32 %v929, %v930
  %v932 = vrot.slane %v931, 4
  %v933 = vadd.f32 %v931, %v932
  %v934 = vrot.slane %v933, 2
  %v935 = vadd.f32 %v933, %v934
  %v936 = vrot.slane %v935, 1
  %v937 = vadd.f32 %v935, %v936
  %v938 = vmul.f32 %v822, %v822
  %v939 = vmul.f32 %v827, %v827
  %v940 = vmul.f32 %v832, %v832
  %v941 = vmul.f32 %v837, %v837
  %v942 = vmul.f32 %v842, %v842
  %v943 = vmul.f32 %v847, %v847
  %v944 = vmul.f32 %v852, %v852
  %v945 = vmul.f32 %v857, %v857
  %v946 = vmul.f32 %v862, %v862
  %v947 = vmul.f32 %v867, %v867
  %v948 = vmul.f32 %v872, %v872
  %v949 = vmul.f32 %v877, %v877
  %v950 = vmul.f32 %v882, %v882
  %v951 = vmul.f32 %v887, %v887
  %v952 = vmul.f32 %v892, %v892
  %v953 = vmul.f32 %v897, %v897
  %v954 = vsel %vm900, %v938, 0.0
  %v955 = vsel %vm900, %v939, 0.0
  %v956 = vadd.f32 %v954, %v955
  %v957 = vsel %vm900, %v940, 0.0
  %v958 = vadd.f32 %v956, %v957
  %v959 = vsel %vm900, %v941, 0.0
  %v960 = vadd.f32 %v958, %v959
  %v961 = vsel %vm900, %v942, 0.0
  %v962 = vadd.f32 %v960, %v961
  %v963 = vsel %vm900, %v943, 0.0
  %v964 = vadd.f32 %v962, %v963
  %v965 = vsel %vm900, %v944, 0.0
  %v966 = vadd.f32 %v964, %v965
  %v967 = vsel %vm900, %v945, 0.0
  %v968 = vadd.f32 %v966, %v967
  %v969 = vsel %vm900, %v946, 0.0
  %v970 = vadd.f32 %v968, %v969
  %v971 = vsel %vm900, %v947, 0.0
  %v972 = vadd.f32 %v970, %v971
  %v973 = vsel %vm900, %v948, 0.0
  %v974 = vadd.f32 %v972, %v973
  %v975 = vsel %vm900, %v949, 0.0
  %v976 = vadd.f32 %v974, %v975
  %v977 = vsel %vm900, %v950, 0.0
  %v978 = vadd.f32 %v976, %v977
  %v979 = vsel %vm900, %v951, 0.0
  %v980 = vadd.f32 %v978, %v979
  %v981 = vsel %vm900, %v952, 0.0
  %v982 = vadd.f32 %v980, %v981
  %v983 = vsel %vm900, %v953, 0.0
  %v984 = vadd.f32 %v982, %v983
  %v985 = vrot.slane %v984, 4
  %v986 = vadd.f32 %v984, %v985
  %v987 = vrot.slane %v986, 2
  %v988 = vadd.f32 %v986, %v987
  %v989 = vrot.slane %v988, 1
  %v990 = vadd.f32 %v988, %v989
  %v991 = vmul.f32 %v937, 0.0078125
  %v992 = vmul.f32 %v990, 0.0078125
  %v993 = vmul.f32 %v991, %v991
  %v994 = vsub.f32 %v992, %v993
  %v995 = vld [vmem:[%s2] sm:$0x1]
  %v996 = vadd.f32 %v994, 1e-05
  %v997 = vrsqrt.pop %v996
  %v998 = vmul.f32 %v995, %v997
  %v999 = vld [vmem:[%s3] sm:$0x1]
  %v1000 = vmul.f32 %v991, %v998
  %v1001 = vsub.f32 %v999, %v1000
  %v1003 = vlaneseq
  %v1004 = vshrl.u32 %v1003, 7
  %v1005 = vsub.s32 0, %v1004
  %v1006 = vrot.slane %v998, %v1005
  %v1008 = vmul.f32 %v822, %v1006
  %v1009 = vmul.f32 %v827, %v1006
  %v1010 = vmul.f32 %v832, %v1006
  %v1011 = vmul.f32 %v837, %v1006
  %v1012 = vmul.f32 %v842, %v1006
  %v1013 = vmul.f32 %v847, %v1006
  %v1014 = vmul.f32 %v852, %v1006
  %v1015 = vmul.f32 %v857, %v1006
  %v1016 = vmul.f32 %v862, %v1006
  %v1017 = vmul.f32 %v867, %v1006
  %v1018 = vmul.f32 %v872, %v1006
  %v1019 = vmul.f32 %v877, %v1006
  %v1020 = vmul.f32 %v882, %v1006
  %v1021 = vmul.f32 %v887, %v1006
  %v1022 = vmul.f32 %v892, %v1006
  %v1023 = vmul.f32 %v897, %v1006
  %v1025 = vlaneseq
  %v1026 = vshrl.u32 %v1025, 7
  %v1027 = vsub.s32 0, %v1026
  %v1028 = vrot.slane %v1001, %v1027
  %v1030 = vadd.f32 %v1008, %v1028
  %v1031 = vadd.f32 %v1009, %v1028
  %v1032 = vadd.f32 %v1010, %v1028
  %v1033 = vadd.f32 %v1011, %v1028
  %v1034 = vadd.f32 %v1012, %v1028
  %v1035 = vadd.f32 %v1013, %v1028
  %v1036 = vadd.f32 %v1014, %v1028
  %v1037 = vadd.f32 %v1015, %v1028
  %v1038 = vadd.f32 %v1016, %v1028
  %v1039 = vadd.f32 %v1017, %v1028
  %v1040 = vadd.f32 %v1018, %v1028
  %v1041 = vadd.f32 %v1019, %v1028
  %v1042 = vadd.f32 %v1020, %v1028
  %v1043 = vadd.f32 %v1021, %v1028
  %v1044 = vadd.f32 %v1022, %v1028
  %v1045 = vadd.f32 %v1023, %v1028
  %v1046 = vmax.f32 %v1030, 0.0
  %v1047 = vmax.f32 %v1031, 0.0
  %v1048 = vmax.f32 %v1032, 0.0
  %v1049 = vmax.f32 %v1033, 0.0
  %v1050 = vmax.f32 %v1034, 0.0
  %v1051 = vmax.f32 %v1035, 0.0
  %v1052 = vmax.f32 %v1036, 0.0
  %v1053 = vmax.f32 %v1037, 0.0
  %v1054 = vmax.f32 %v1038, 0.0
  %v1055 = vmax.f32 %v1039, 0.0
  %v1056 = vmax.f32 %v1040, 0.0
  %v1057 = vmax.f32 %v1041, 0.0
  %v1058 = vmax.f32 %v1042, 0.0
  %v1059 = vmax.f32 %v1043, 0.0
  %v1060 = vmax.f32 %v1044, 0.0
  %v1061 = vmax.f32 %v1045, 0.0
  %v1078 = vrot.slane %v1046, 7
  %v1079 = vrot.slane %v1047, 7
  %v1080 = vrot.slane %v1048, 7
  %v1081 = vrot.slane %v1049, 7
  %v1082 = vrot.slane %v1050, 7
  %v1083 = vrot.slane %v1051, 7
  %v1084 = vrot.slane %v1052, 7
  %v1085 = vrot.slane %v1053, 7
  %v1086 = vrot.slane %v1054, 7
  %v1087 = vrot.slane %v1055, 7
  %v1088 = vrot.slane %v1056, 7
  %v1089 = vrot.slane %v1057, 7
  %v1090 = vrot.slane %v1058, 7
  %v1091 = vrot.slane %v1059, 7
  %v1092 = vrot.slane %v1060, 7
  %v1093 = vrot.slane %v1061, 7
  %v1110 = vsel %vm93, 0.0, %v1078
  %v1111 = vsel %vm93, 0.0, %v1079
  %v1112 = vsel %vm93, 0.0, %v1080
  %v1113 = vsel %vm93, 0.0, %v1081
  %v1114 = vsel %vm93, 0.0, %v1082
  %v1115 = vsel %vm93, 0.0, %v1083
  %v1116 = vsel %vm93, 0.0, %v1084
  %v1117 = vsel %vm93, 0.0, %v1085
  %v1118 = vsel %vm93, 0.0, %v1086
  %v1119 = vsel %vm93, 0.0, %v1087
  %v1120 = vsel %vm93, 0.0, %v1088
  %v1121 = vsel %vm93, 0.0, %v1089
  %v1122 = vsel %vm93, 0.0, %v1090
  %v1123 = vsel %vm93, 0.0, %v1091
  %v1124 = vsel %vm93, 0.0, %v1092
  %v1125 = vsel %vm93, 0.0, %v1093
  %v1126 = vsel %vm93, %v1078, 0.0
  %v1127 = vsel %vm93, %v1079, 0.0
  %v1128 = vsel %vm93, %v1080, 0.0
  %v1129 = vsel %vm93, %v1081, 0.0
  %v1130 = vsel %vm93, %v1082, 0.0
  %v1131 = vsel %vm93, %v1083, 0.0
  %v1132 = vsel %vm93, %v1084, 0.0
  %v1133 = vsel %vm93, %v1085, 0.0
  %v1134 = vsel %vm93, %v1086, 0.0
  %v1135 = vsel %vm93, %v1087, 0.0
  %v1136 = vsel %vm93, %v1088, 0.0
  %v1137 = vsel %vm93, %v1089, 0.0
  %v1138 = vsel %vm93, %v1090, 0.0
  %v1139 = vsel %vm93, %v1091, 0.0
  %v1140 = vsel %vm93, %v1092, 0.0
  %v1141 = vsel %vm93, %v1093, 0.0
  %v1170 = vrot.slane %v1110, 1
  %v1171 = vrot.slane %v1126, 1
  %v1172 = vsel %vm158, %v1170, %v1171
  %v1173 = vrot.slane %v1111, 1
  %v1174 = vrot.slane %v1127, 1
  %v1175 = vsel %vm158, %v1173, %v1174
  %v1176 = vrot.slane %v1112, 1
  %v1177 = vrot.slane %v1128, 1
  %v1178 = vsel %vm158, %v1176, %v1177
  %v1179 = vrot.slane %v1113, 1
  %v1180 = vrot.slane %v1129, 1
  %v1181 = vsel %vm158, %v1179, %v1180
  %v1182 = vrot.slane %v1114, 1
  %v1183 = vrot.slane %v1130, 1
  %v1184 = vsel %vm158, %v1182, %v1183
  %v1185 = vrot.slane %v1115, 1
  %v1186 = vrot.slane %v1131, 1
  %v1187 = vsel %vm158, %v1185, %v1186
  %v1188 = vrot.slane %v1116, 1
  %v1189 = vrot.slane %v1132, 1
  %v1190 = vsel %vm158, %v1188, %v1189
  %v1191 = vrot.slane %v1118, 1
  %v1192 = vrot.slane %v1134, 1
  %v1193 = vsel %vm158, %v1191, %v1192
  %v1194 = vrot.slane %v1119, 1
  %v1195 = vrot.slane %v1135, 1
  %v1196 = vsel %vm158, %v1194, %v1195
  %v1197 = vrot.slane %v1120, 1
  %v1198 = vrot.slane %v1136, 1
  %v1199 = vsel %vm158, %v1197, %v1198
  %v1200 = vrot.slane %v1121, 1
  %v1201 = vrot.slane %v1137, 1
  %v1202 = vsel %vm158, %v1200, %v1201
  %v1203 = vrot.slane %v1122, 1
  %v1204 = vrot.slane %v1138, 1
  %v1205 = vsel %vm158, %v1203, %v1204
  %v1206 = vrot.slane %v1123, 1
  %v1207 = vrot.slane %v1139, 1
  %v1208 = vsel %vm158, %v1206, %v1207
  %v1209 = vrot.slane %v1124, 1
  %v1210 = vrot.slane %v1140, 1
  %v1211 = vsel %vm158, %v1209, %v1210
  %v1212 = vrot.slane %v1110, 2
  %v1213 = vrot.slane %v1126, 2
  %v1214 = vsel %vm204, %v1212, %v1213
  %v1215 = vrot.slane %v1111, 2
  %v1216 = vrot.slane %v1127, 2
  %v1217 = vsel %vm204, %v1215, %v1216
  %v1218 = vrot.slane %v1112, 2
  %v1219 = vrot.slane %v1128, 2
  %v1220 = vsel %vm204, %v1218, %v1219
  %v1221 = vrot.slane %v1113, 2
  %v1222 = vrot.slane %v1129, 2
  %v1223 = vsel %vm204, %v1221, %v1222
  %v1224 = vrot.slane %v1114, 2
  %v1225 = vrot.slane %v1130, 2
  %v1226 = vsel %vm204, %v1224, %v1225
  %v1227 = vrot.slane %v1115, 2
  %v1228 = vrot.slane %v1131, 2
  %v1229 = vsel %vm204, %v1227, %v1228
  %v1230 = vrot.slane %v1116, 2
  %v1231 = vrot.slane %v1132, 2
  %v1232 = vsel %vm204, %v1230, %v1231
  %v1233 = vrot.slane %v1118, 2
  %v1234 = vrot.slane %v1134, 2
  %v1235 = vsel %vm204, %v1233, %v1234
  %v1236 = vrot.slane %v1119, 2
  %v1237 = vrot.slane %v1135, 2
  %v1238 = vsel %vm204, %v1236, %v1237
  %v1239 = vrot.slane %v1120, 2
  %v1240 = vrot.slane %v1136, 2
  %v1241 = vsel %vm204, %v1239, %v1240
  %v1242 = vrot.slane %v1121, 2
  %v1243 = vrot.slane %v1137, 2
  %v1244 = vsel %vm204, %v1242, %v1243
  %v1245 = vrot.slane %v1122, 2
  %v1246 = vrot.slane %v1138, 2
  %v1247 = vsel %vm204, %v1245, %v1246
  %v1248 = vrot.slane %v1123, 2
  %v1249 = vrot.slane %v1139, 2
  %v1250 = vsel %vm204, %v1248, %v1249
  %v1251 = vrot.slane %v1124, 2
  %v1252 = vrot.slane %v1140, 2
  %v1253 = vsel %vm204, %v1251, %v1252
  %v1258 = vrot.slane %v1117, 1
  %v1259 = vrot.slane %v1133, 1
  %v1260 = vsel %vm158, %v1258, %v1259
  %v1261 = vrot.slane %v1125, 1
  %v1262 = vrot.slane %v1141, 1
  %v1263 = vsel %vm158, %v1261, %v1262
  %v1264 = vrot.slane %v1117, 2
  %v1265 = vrot.slane %v1133, 2
  %v1266 = vsel %vm204, %v1264, %v1265
  %v1267 = vrot.slane %v1125, 2
  %v1268 = vrot.slane %v1141, 2
  %v1269 = vsel %vm204, %v1267, %v1268
  %1270 = vrot.lane.b32.xlu0 %v161, 8
  %v1271 = vpop.permute.xlu0 %1270
  %1272 = vrot.lane.b32.xlu0 %v1172, 8
  %v1273 = vpop.permute.xlu0 %1272
  %1274 = vrot.lane.b32.xlu0 %v1175, 8
  %v1275 = vpop.permute.xlu0 %1274
  %1276 = vrot.lane.b32.xlu0 %v1178, 8
  %v1277 = vpop.permute.xlu0 %1276
  %1278 = vrot.lane.b32.xlu0 %v1181, 8
  %v1279 = vpop.permute.xlu0 %1278
  %1280 = vrot.lane.b32.xlu0 %v1184, 8
  %v1281 = vpop.permute.xlu0 %1280
  %1282 = vrot.lane.b32.xlu0 %v1187, 8
  %v1283 = vpop.permute.xlu0 %1282
  %1284 = vrot.lane.b32.xlu0 %v1190, 8
  %v1285 = vpop.permute.xlu0 %1284
  %1286 = vrot.lane.b32.xlu0 %v1193, 8
  %v1287 = vpop.permute.xlu0 %1286
  %1288 = vrot.lane.b32.xlu0 %v1196, 8
  %v1289 = vpop.permute.xlu0 %1288
  %1290 = vrot.lane.b32.xlu0 %v1199, 8
  %v1291 = vpop.permute.xlu0 %1290
  %1292 = vrot.lane.b32.xlu0 %v1202, 8
  %v1293 = vpop.permute.xlu0 %1292
  %1294 = vrot.lane.b32.xlu0 %v1205, 8
  %v1295 = vpop.permute.xlu0 %1294
  %1296 = vrot.lane.b32.xlu0 %v1208, 8
  %v1297 = vpop.permute.xlu0 %1296
  %1298 = vrot.lane.b32.xlu0 %v1211, 8
  %v1299 = vpop.permute.xlu0 %1298
  %1315 = vrot.lane.b32.xlu0 %v207, 16
  %v1316 = vpop.permute.xlu0 %1315
  %1317 = vrot.lane.b32.xlu0 %v1214, 16
  %v1318 = vpop.permute.xlu0 %1317
  %1319 = vrot.lane.b32.xlu0 %v1217, 16
  %v1320 = vpop.permute.xlu0 %1319
  %1321 = vrot.lane.b32.xlu0 %v1220, 16
  %v1322 = vpop.permute.xlu0 %1321
  %1323 = vrot.lane.b32.xlu0 %v1223, 16
  %v1324 = vpop.permute.xlu0 %1323
  %1325 = vrot.lane.b32.xlu0 %v1226, 16
  %v1326 = vpop.permute.xlu0 %1325
  %1327 = vrot.lane.b32.xlu0 %v1229, 16
  %v1328 = vpop.permute.xlu0 %1327
  %1329 = vrot.lane.b32.xlu0 %v1232, 16
  %v1330 = vpop.permute.xlu0 %1329
  %1331 = vrot.lane.b32.xlu0 %v1235, 16
  %v1332 = vpop.permute.xlu0 %1331
  %1333 = vrot.lane.b32.xlu0 %v1238, 16
  %v1334 = vpop.permute.xlu0 %1333
  %1335 = vrot.lane.b32.xlu0 %v1241, 16
  %v1336 = vpop.permute.xlu0 %1335
  %1337 = vrot.lane.b32.xlu0 %v1244, 16
  %v1338 = vpop.permute.xlu0 %1337
  %1339 = vrot.lane.b32.xlu0 %v1247, 16
  %v1340 = vpop.permute.xlu0 %1339
  %1341 = vrot.lane.b32.xlu0 %v1250, 16
  %v1342 = vpop.permute.xlu0 %1341
  %1343 = vrot.lane.b32.xlu0 %v1253, 16
  %v1344 = vpop.permute.xlu0 %1343
  %1360 = vrot.lane.b32.xlu0 %v1110, 24
  %v1361 = vpop.permute.xlu0 %1360
  %1362 = vrot.lane.b32.xlu0 %v1111, 24
  %v1363 = vpop.permute.xlu0 %1362
  %1364 = vrot.lane.b32.xlu0 %v1112, 24
  %v1365 = vpop.permute.xlu0 %1364
  %1366 = vrot.lane.b32.xlu0 %v1113, 24
  %v1367 = vpop.permute.xlu0 %1366
  %1368 = vrot.lane.b32.xlu0 %v1114, 24
  %v1369 = vpop.permute.xlu0 %1368
  %1370 = vrot.lane.b32.xlu0 %v1115, 24
  %v1371 = vpop.permute.xlu0 %1370
  %1372 = vrot.lane.b32.xlu0 %v1116, 24
  %v1373 = vpop.permute.xlu0 %1372
  %1374 = vrot.lane.b32.xlu0 %v1117, 24
  %v1375 = vpop.permute.xlu0 %1374
  %1376 = vrot.lane.b32.xlu0 %v1118, 24
  %v1377 = vpop.permute.xlu0 %1376
  %1378 = vrot.lane.b32.xlu0 %v1119, 24
  %v1379 = vpop.permute.xlu0 %1378
  %1380 = vrot.lane.b32.xlu0 %v1120, 24
  %v1381 = vpop.permute.xlu0 %1380
  %1382 = vrot.lane.b32.xlu0 %v1121, 24
  %v1383 = vpop.permute.xlu0 %1382
  %1384 = vrot.lane.b32.xlu0 %v1122, 24
  %v1385 = vpop.permute.xlu0 %1384
  %1386 = vrot.lane.b32.xlu0 %v1123, 24
  %v1387 = vpop.permute.xlu0 %1386
  %1388 = vrot.lane.b32.xlu0 %v1124, 24
  %v1389 = vpop.permute.xlu0 %1388
  %1390 = vrot.lane.b32.xlu0 %v1125, 24
  %v1391 = vpop.permute.xlu0 %1390
  %1408 = vrot.lane.b32.xlu0 %v1172, 32
  %v1409 = vpop.permute.xlu0 %1408
  %1410 = vrot.lane.b32.xlu0 %v1175, 32
  %v1411 = vpop.permute.xlu0 %1410
  %1412 = vrot.lane.b32.xlu0 %v1178, 32
  %v1413 = vpop.permute.xlu0 %1412
  %1414 = vrot.lane.b32.xlu0 %v1181, 32
  %v1415 = vpop.permute.xlu0 %1414
  %1416 = vrot.lane.b32.xlu0 %v1184, 32
  %v1417 = vpop.permute.xlu0 %1416
  %1418 = vrot.lane.b32.xlu0 %v1187, 32
  %v1419 = vpop.permute.xlu0 %1418
  %1420 = vrot.lane.b32.xlu0 %v1190, 32
  %v1421 = vpop.permute.xlu0 %1420
  %1422 = vrot.lane.b32.xlu0 %v1260, 32
  %v1423 = vpop.permute.xlu0 %1422
  %1424 = vrot.lane.b32.xlu0 %v1193, 32
  %v1425 = vpop.permute.xlu0 %1424
  %1426 = vrot.lane.b32.xlu0 %v1196, 32
  %v1427 = vpop.permute.xlu0 %1426
  %1428 = vrot.lane.b32.xlu0 %v1199, 32
  %v1429 = vpop.permute.xlu0 %1428
  %1430 = vrot.lane.b32.xlu0 %v1202, 32
  %v1431 = vpop.permute.xlu0 %1430
  %1432 = vrot.lane.b32.xlu0 %v1205, 32
  %v1433 = vpop.permute.xlu0 %1432
  %1434 = vrot.lane.b32.xlu0 %v1208, 32
  %v1435 = vpop.permute.xlu0 %1434
  %1436 = vrot.lane.b32.xlu0 %v1211, 32
  %v1437 = vpop.permute.xlu0 %1436
  %1438 = vrot.lane.b32.xlu0 %v1263, 32
  %v1439 = vpop.permute.xlu0 %1438
  %1456 = vrot.lane.b32.xlu0 %v1214, 40
  %v1457 = vpop.permute.xlu0 %1456
  %1458 = vrot.lane.b32.xlu0 %v1217, 40
  %v1459 = vpop.permute.xlu0 %1458
  %1460 = vrot.lane.b32.xlu0 %v1220, 40
  %v1461 = vpop.permute.xlu0 %1460
  %1462 = vrot.lane.b32.xlu0 %v1223, 40
  %v1463 = vpop.permute.xlu0 %1462
  %1464 = vrot.lane.b32.xlu0 %v1226, 40
  %v1465 = vpop.permute.xlu0 %1464
  %1466 = vrot.lane.b32.xlu0 %v1229, 40
  %v1467 = vpop.permute.xlu0 %1466
  %1468 = vrot.lane.b32.xlu0 %v1232, 40
  %v1469 = vpop.permute.xlu0 %1468
  %1470 = vrot.lane.b32.xlu0 %v1266, 40
  %v1471 = vpop.permute.xlu0 %1470
  %1472 = vrot.lane.b32.xlu0 %v1235, 40
  %v1473 = vpop.permute.xlu0 %1472
  %1474 = vrot.lane.b32.xlu0 %v1238, 40
  %v1475 = vpop.permute.xlu0 %1474
  %1476 = vrot.lane.b32.xlu0 %v1241, 40
  %v1477 = vpop.permute.xlu0 %1476
  %1478 = vrot.lane.b32.xlu0 %v1244, 40
  %v1479 = vpop.permute.xlu0 %1478
  %1480 = vrot.lane.b32.xlu0 %v1247, 40
  %v1481 = vpop.permute.xlu0 %1480
  %1482 = vrot.lane.b32.xlu0 %v1250, 40
  %v1483 = vpop.permute.xlu0 %1482
  %1484 = vrot.lane.b32.xlu0 %v1253, 40
  %v1485 = vpop.permute.xlu0 %1484
  %1486 = vrot.lane.b32.xlu0 %v1269, 40
  %v1487 = vpop.permute.xlu0 %1486
  %1504 = vrot.lane.b32.xlu0 %v1111, 48
  %v1505 = vpop.permute.xlu0 %1504
  %1506 = vrot.lane.b32.xlu0 %v1112, 48
  %v1507 = vpop.permute.xlu0 %1506
  %1508 = vrot.lane.b32.xlu0 %v1113, 48
  %v1509 = vpop.permute.xlu0 %1508
  %1510 = vrot.lane.b32.xlu0 %v1114, 48
  %v1511 = vpop.permute.xlu0 %1510
  %1512 = vrot.lane.b32.xlu0 %v1115, 48
  %v1513 = vpop.permute.xlu0 %1512
  %1514 = vrot.lane.b32.xlu0 %v1116, 48
  %v1515 = vpop.permute.xlu0 %1514
  %1516 = vrot.lane.b32.xlu0 %v1117, 48
  %v1517 = vpop.permute.xlu0 %1516
  %1518 = vrot.lane.b32.xlu0 %v94, 48
  %v1519 = vpop.permute.xlu0 %1518
  %1520 = vrot.lane.b32.xlu0 %v1119, 48
  %v1521 = vpop.permute.xlu0 %1520
  %1522 = vrot.lane.b32.xlu0 %v1120, 48
  %v1523 = vpop.permute.xlu0 %1522
  %1524 = vrot.lane.b32.xlu0 %v1121, 48
  %v1525 = vpop.permute.xlu0 %1524
  %1526 = vrot.lane.b32.xlu0 %v1122, 48
  %v1527 = vpop.permute.xlu0 %1526
  %1528 = vrot.lane.b32.xlu0 %v1123, 48
  %v1529 = vpop.permute.xlu0 %1528
  %1530 = vrot.lane.b32.xlu0 %v1124, 48
  %v1531 = vpop.permute.xlu0 %1530
  %1532 = vrot.lane.b32.xlu0 %v1125, 48
  %v1533 = vpop.permute.xlu0 %1532
  %1549 = vrot.lane.b32.xlu0 %v1175, 56
  %v1550 = vpop.permute.xlu0 %1549
  %1551 = vrot.lane.b32.xlu0 %v1178, 56
  %v1552 = vpop.permute.xlu0 %1551
  %1553 = vrot.lane.b32.xlu0 %v1181, 56
  %v1554 = vpop.permute.xlu0 %1553
  %1555 = vrot.lane.b32.xlu0 %v1184, 56
  %v1556 = vpop.permute.xlu0 %1555
  %1557 = vrot.lane.b32.xlu0 %v1187, 56
  %v1558 = vpop.permute.xlu0 %1557
  %1559 = vrot.lane.b32.xlu0 %v1190, 56
  %v1560 = vpop.permute.xlu0 %1559
  %1561 = vrot.lane.b32.xlu0 %v1260, 56
  %v1562 = vpop.permute.xlu0 %1561
  %1563 = vrot.lane.b32.xlu0 %v161, 56
  %v1564 = vpop.permute.xlu0 %1563
  %1565 = vrot.lane.b32.xlu0 %v1196, 56
  %v1566 = vpop.permute.xlu0 %1565
  %1567 = vrot.lane.b32.xlu0 %v1199, 56
  %v1568 = vpop.permute.xlu0 %1567
  %1569 = vrot.lane.b32.xlu0 %v1202, 56
  %v1570 = vpop.permute.xlu0 %1569
  %1571 = vrot.lane.b32.xlu0 %v1205, 56
  %v1572 = vpop.permute.xlu0 %1571
  %1573 = vrot.lane.b32.xlu0 %v1208, 56
  %v1574 = vpop.permute.xlu0 %1573
  %1575 = vrot.lane.b32.xlu0 %v1211, 56
  %v1576 = vpop.permute.xlu0 %1575
  %1577 = vrot.lane.b32.xlu0 %v1263, 56
  %v1578 = vpop.permute.xlu0 %1577
  %1594 = vrot.lane.b32.xlu0 %v1217, 64
  %v1595 = vpop.permute.xlu0 %1594
  %1596 = vrot.lane.b32.xlu0 %v1220, 64
  %v1597 = vpop.permute.xlu0 %1596
  %1598 = vrot.lane.b32.xlu0 %v1223, 64
  %v1599 = vpop.permute.xlu0 %1598
  %1600 = vrot.lane.b32.xlu0 %v1226, 64
  %v1601 = vpop.permute.xlu0 %1600
  %1602 = vrot.lane.b32.xlu0 %v1229, 64
  %v1603 = vpop.permute.xlu0 %1602
  %1604 = vrot.lane.b32.xlu0 %v1232, 64
  %v1605 = vpop.permute.xlu0 %1604
  %1606 = vrot.lane.b32.xlu0 %v1266, 64
  %v1607 = vpop.permute.xlu0 %1606
  %1608 = vrot.lane.b32.xlu0 %v207, 64
  %v1609 = vpop.permute.xlu0 %1608
  %1610 = vrot.lane.b32.xlu0 %v1238, 64
  %v1611 = vpop.permute.xlu0 %1610
  %1612 = vrot.lane.b32.xlu0 %v1241, 64
  %v1613 = vpop.permute.xlu0 %1612
  %1614 = vrot.lane.b32.xlu0 %v1244, 64
  %v1615 = vpop.permute.xlu0 %1614
  %1616 = vrot.lane.b32.xlu0 %v1247, 64
  %v1617 = vpop.permute.xlu0 %1616
  %1618 = vrot.lane.b32.xlu0 %v1250, 64
  %v1619 = vpop.permute.xlu0 %1618
  %1620 = vrot.lane.b32.xlu0 %v1253, 64
  %v1621 = vpop.permute.xlu0 %1620
  %1622 = vrot.lane.b32.xlu0 %v1269, 64
  %v1623 = vpop.permute.xlu0 %1622
  %v1639 = vsel %vm900, %v94, %v1271
  %v1640 = vsel %vm900, %v1110, %v1273
  %v1641 = vsel %vm900, %v1111, %v1275
  %v1642 = vsel %vm900, %v1112, %v1277
  %v1643 = vsel %vm900, %v1113, %v1279
  %v1644 = vsel %vm900, %v1114, %v1281
  %v1645 = vsel %vm900, %v1115, %v1283
  %v1646 = vsel %vm900, %v1116, %v1285
  %v1647 = vsel %vm900, %v1118, %v1287
  %v1648 = vsel %vm900, %v1119, %v1289
  %v1649 = vsel %vm900, %v1120, %v1291
  %v1650 = vsel %vm900, %v1121, %v1293
  %v1651 = vsel %vm900, %v1122, %v1295
  %v1652 = vsel %vm900, %v1123, %v1297
  %v1653 = vsel %vm900, %v1124, %v1299
  %v1654 = vsel %vm590, %v1639, %v1316
  %v1655 = vsel %vm590, %v1640, %v1318
  %v1656 = vsel %vm590, %v1641, %v1320
  %v1657 = vsel %vm590, %v1642, %v1322
  %v1658 = vsel %vm590, %v1643, %v1324
  %v1659 = vsel %vm590, %v1644, %v1326
  %v1660 = vsel %vm590, %v1645, %v1328
  %v1661 = vsel %vm590, %v1646, %v1330
  %v1662 = vsel %vm590, %v1647, %v1332
  %v1663 = vsel %vm590, %v1648, %v1334
  %v1664 = vsel %vm590, %v1649, %v1336
  %v1665 = vsel %vm590, %v1650, %v1338
  %v1666 = vsel %vm590, %v1651, %v1340
  %v1667 = vsel %vm590, %v1652, %v1342
  %v1668 = vsel %vm590, %v1653, %v1344
  %vm1669 = vcmask 195584
  %v1670 = vsel %vm1669, %v1654, %v1361
  %v1671 = vsel %vm1669, %v1655, %v1363
  %v1672 = vsel %vm1669, %v1656, %v1365
  %v1673 = vsel %vm1669, %v1657, %v1367
  %v1674 = vsel %vm1669, %v1658, %v1369
  %v1675 = vsel %vm1669, %v1659, %v1371
  %v1676 = vsel %vm1669, %v1660, %v1373
  %v1677 = vsel %vm1669, %v1661, %v1375
  %v1678 = vsel %vm1669, %v1654, %v1377
  %v1679 = vsel %vm1669, %v1662, %v1379
  %v1680 = vsel %vm1669, %v1663, %v1381
  %v1681 = vsel %vm1669, %v1664, %v1383
  %v1682 = vsel %vm1669, %v1665, %v1385
  %v1683 = vsel %vm1669, %v1666, %v1387
  %v1684 = vsel %vm1669, %v1667, %v1389
  %v1685 = vsel %vm1669, %v1668, %v1391
  %v1686 = vsel %vm606, %v1670, %v1409
  %v1687 = vsel %vm606, %v1671, %v1411
  %v1688 = vsel %vm606, %v1672, %v1413
  %v1689 = vsel %vm606, %v1673, %v1415
  %v1690 = vsel %vm606, %v1674, %v1417
  %v1691 = vsel %vm606, %v1675, %v1419
  %v1692 = vsel %vm606, %v1676, %v1421
  %v1693 = vsel %vm606, %v1677, %v1423
  %v1694 = vsel %vm606, %v1678, %v1425
  %v1695 = vsel %vm606, %v1679, %v1427
  %v1696 = vsel %vm606, %v1680, %v1429
  %v1697 = vsel %vm606, %v1681, %v1431
  %v1698 = vsel %vm606, %v1682, %v1433
  %v1699 = vsel %vm606, %v1683, %v1435
  %v1700 = vsel %vm606, %v1684, %v1437
  %v1701 = vsel %vm606, %v1685, %v1439
  %vm1702 = vcmask 326656
  %v1703 = vsel %vm1702, %v1686, %v1457
  %v1704 = vsel %vm1702, %v1687, %v1459
  %v1705 = vsel %vm1702, %v1688, %v1461
  %v1706 = vsel %vm1702, %v1689, %v1463
  %v1707 = vsel %vm1702, %v1690, %v1465
  %v1708 = vsel %vm1702, %v1691, %v1467
  %v1709 = vsel %vm1702, %v1692, %v1469
  %v1710 = vsel %vm1702, %v1693, %v1471
  %v1711 = vsel %vm1702, %v1694, %v1473
  %v1712 = vsel %vm1702, %v1695, %v1475
  %v1713 = vsel %vm1702, %v1696, %v1477
  %v1714 = vsel %vm1702, %v1697, %v1479
  %v1715 = vsel %vm1702, %v1698, %v1481
  %v1716 = vsel %vm1702, %v1699, %v1483
  %v1717 = vsel %vm1702, %v1700, %v1485
  %v1718 = vsel %vm1702, %v1701, %v1487
  %v1719 = vsel %vm622, %v1703, %v1505
  %v1720 = vsel %vm622, %v1704, %v1507
  %v1721 = vsel %vm622, %v1705, %v1509
  %v1722 = vsel %vm622, %v1706, %v1511
  %v1723 = vsel %vm622, %v1707, %v1513
  %v1724 = vsel %vm622, %v1708, %v1515
  %v1725 = vsel %vm622, %v1709, %v1517
  %v1726 = vsel %vm622, %v1710, %v1519
  %v1727 = vsel %vm622, %v1711, %v1521
  %v1728 = vsel %vm622, %v1712, %v1523
  %v1729 = vsel %vm622, %v1713, %v1525
  %v1730 = vsel %vm622, %v1714, %v1527
  %v1731 = vsel %vm622, %v1715, %v1529
  %v1732 = vsel %vm622, %v1716, %v1531
  %v1733 = vsel %vm622, %v1717, %v1533
  %v1734 = vsel %vm622, %v1718, %v1519
  %vm1735 = vcmask 457728
  %v1736 = vsel %vm1735, %v1719, %v1550
  %v1737 = vsel %vm1735, %v1720, %v1552
  %v1738 = vsel %vm1735, %v1721, %v1554
  %v1739 = vsel %vm1735, %v1722, %v1556
  %v1740 = vsel %vm1735, %v1723, %v1558
  %v1741 = vsel %vm1735, %v1724, %v1560
  %v1742 = vsel %vm1735, %v1725, %v1562
  %v1743 = vsel %vm1735, %v1726, %v1564
  %v1744 = vsel %vm1735, %v1727, %v1566
  %v1745 = vsel %vm1735, %v1728, %v1568
  %v1746 = vsel %vm1735, %v1729, %v1570
  %v1747 = vsel %vm1735, %v1730, %v1572
  %v1748 = vsel %vm1735, %v1731, %v1574
  %v1749 = vsel %vm1735, %v1732, %v1576
  %v1750 = vsel %vm1735, %v1733, %v1578
  %v1751 = vsel %vm1735, %v1734, %v1564
  %v1752 = vsel %vm639, %v1736, %v1595
  %v1753 = vsel %vm639, %v1737, %v1597
  %v1754 = vsel %vm639, %v1738, %v1599
  %v1755 = vsel %vm639, %v1739, %v1601
  %v1756 = vsel %vm639, %v1740, %v1603
  %v1757 = vsel %vm639, %v1741, %v1605
  %v1758 = vsel %vm639, %v1742, %v1607
  %v1759 = vsel %vm639, %v1743, %v1609
  %v1760 = vsel %vm639, %v1744, %v1611
  %v1761 = vsel %vm639, %v1745, %v1613
  %v1762 = vsel %vm639, %v1746, %v1615
  %v1763 = vsel %vm639, %v1747, %v1617
  %v1764 = vsel %vm639, %v1748, %v1619
  %v1765 = vsel %vm639, %v1749, %v1621
  %v1766 = vsel %vm639, %v1750, %v1623
  %v1767 = vsel %vm639, %v1751, %v1609
  %v1768 = vld [vmem:[%s4] sm:$0xff]
  %v1769 = vld [vmem:[%s4 + $0x8] sm:$0xff]
  %v1770 = vld [vmem:[%s4 + $0x10] sm:$0xff]
  %v1771 = vld [vmem:[%s4 + $0x18] sm:$0xff]
  %v1772 = vld [vmem:[%s4 + $0x20] sm:$0xff]
  %v1773 = vld [vmem:[%s4 + $0x28] sm:$0xff]
  %v1774 = vld [vmem:[%s4 + $0x30] sm:$0xff]
  %v1775 = vld [vmem:[%s4 + $0x38] sm:$0xff]
  %v1776 = vld [vmem:[%s4 + $0x40] sm:$0xff]
  %vm1777 = vcmask 588800
  %v1779 = vsel %vm1777, %v1752, 0
  %v1782 = vsel %vm1777, %v1753, 0
  %v1785 = vsel %vm1777, %v1754, 0
  %v1788 = vsel %vm1777, %v1755, 0
  %v1791 = vsel %vm1777, %v1756, 0
  %v1794 = vsel %vm1777, %v1757, 0
  %v1797 = vsel %vm1777, %v1758, 0
  %v1800 = vsel %vm1777, %v1759, 0
  %v1803 = vsel %vm1777, %v1760, 0
  %v1806 = vsel %vm1777, %v1761, 0
  %v1809 = vsel %vm1777, %v1762, 0
  %v1812 = vsel %vm1777, %v1763, 0
  %v1815 = vsel %vm1777, %v1764, 0
  %v1818 = vsel %vm1777, %v1765, 0
  %v1821 = vsel %vm1777, %v1766, 0
  %v1824 = vsel %vm1777, %v1767, 0
  %1826 = vmatprep.subr.mxu0 0.0
  %1827 = vmatpush1.msra.mxu0 0.0
  %1828 = vmatprep.subr.mxu0 0.0
  %1829 = vmatpush1.msra.mxu0 0.0
  %1830 = vmatprep.subr.mxu0 0.0
  %1831 = vmatpush1.msra.mxu0 0.0
  %1832 = vmatprep.subr.mxu0 0.0
  %1833 = vmatpush1.msra.mxu0 0.0
  %1834 = vmatprep.subr.mxu0 0.0
  %1835 = vmatpush1.msra.mxu0 0.0
  %1836 = vmatprep.subr.mxu0 0.0
  %1837 = vmatpush1.msra.mxu0 0.0
  %1838 = vmatprep.subr.mxu0 0.0
  %1839 = vmatpush1.msra.mxu0 0.0
  %1840 = vmatprep.subr.mxu0 0.0
  %1841 = vmatpush1.msra.mxu0 %v1776
  %1842 = vmatprep.subr.mxu0 0.0
  %1843 = vmatpush1.msra.mxu0 %v1775
  %1844 = vmatprep.subr.mxu0 0.0
  %1845 = vmatpush1.msra.mxu0 %v1774
  %1846 = vmatprep.subr.mxu0 0.0
  %1847 = vmatpush1.msra.mxu0 %v1773
  %1848 = vmatprep.subr.mxu0 0.0
  %1849 = vmatpush1.msra.mxu0 %v1772
  %1850 = vmatprep.subr.mxu0 0.0
  %1851 = vmatpush1.msra.mxu0 %v1771
  %1852 = vmatprep.subr.mxu0 0.0
  %1853 = vmatpush1.msra.mxu0 %v1770
  %1854 = vmatprep.subr.mxu0 0.0
  %1855 = vmatpush1.msra.mxu0 %v1769
  %1856 = vmatprep.subr.mxu0 0.0
  %1857 = vmatpush1.msra.mxu0 %v1768
  %1858 = vmatprep.subr.mxu0 0.0
  %1859 = vmatpush2.msra.mxu0 0.0
  %1860 = vmatprep.subr.mxu0 0.0
  %1861 = vmatpush2.msra.mxu0 0.0
  %1862 = vmatprep.subr.mxu0 0.0
  %1863 = vmatpush2.msra.mxu0 0.0
  %1864 = vmatprep.subr.mxu0 0.0
  %1865 = vmatpush2.msra.mxu0 0.0
  %1866 = vmatprep.subr.mxu0 0.0
  %1867 = vmatpush2.msra.mxu0 0.0
  %1868 = vmatprep.subr.mxu0 0.0
  %1869 = vmatpush2.msra.mxu0 0.0
  %1870 = vmatprep.subr.mxu0 0.0
  %1871 = vmatpush2.msra.mxu0 0.0
  %1872 = vmatprep.subr.mxu0 0.0
  %1873 = vmatpush2.msra.mxu0 0.0
  %1874 = vmatprep.subr.mxu0 0.0
  %1875 = vmatpush2.msra.mxu0 0.0
  %1876 = vmatprep.subr.mxu0 0.0
  %1877 = vmatpush2.msra.mxu0 0.0
  %1878 = vmatprep.subr.mxu0 0.0
  %1879 = vmatpush2.msra.mxu0 0.0
  %1880 = vmatprep.subr.mxu0 0.0
  %1881 = vmatpush2.msra.mxu0 0.0
  %1882 = vmatprep.subr.mxu0 0.0
  %1883 = vmatpush2.msra.mxu0 0.0
  %1884 = vmatprep.subr.mxu0 0.0
  %1885 = vmatpush2.msra.mxu0 0.0
  %1886 = vmatprep.subr.mxu0 0.0
  %1887 = vmatpush2.msra.mxu0 0.0
  %1888 = vmatprep.subr.mxu0 0.0
  %1889 = vmatpush2.msra.mxu0 0.0
  %1890 = vmatprep.mubr.f32.mxu0 0.0
  %1891 = vmatmul.mubr.f32.gmra.mxu0 %v1779
  %v1892 = vpop.f32.mrf.mxu0
  %v1893 = vadd.f32 0.0, %v1892
  %v1894 = vpop.f32.mrf.mxu0
  %1895 = vmatprep.mubr.f32.mxu0 0.0
  %1896 = vmatmul.mubr.f32.gmra.mxu0 %v1782
  %v1897 = vpop.f32.mrf.mxu0
  %v1898 = vadd.f32 0.0, %v1897
  %v1899 = vpop.f32.mrf.mxu0
  %1900 = vmatprep.mubr.f32.mxu0 0.0
  %1901 = vmatmul.mubr.f32.gmra.mxu0 %v1785
  %v1902 = vpop.f32.mrf.mxu0
  %v1903 = vadd.f32 0.0, %v1902
  %v1904 = vpop.f32.mrf.mxu0
  %1905 = vmatprep.mubr.f32.mxu0 0.0
  %1906 = vmatmul.mubr.f32.gmra.mxu0 %v1788
  %v1907 = vpop.f32.mrf.mxu0
  %v1908 = vadd.f32 0.0, %v1907
  %v1909 = vpop.f32.mrf.mxu0
  %1910 = vmatprep.mubr.f32.mxu0 0.0
  %1911 = vmatmul.mubr.f32.gmra.mxu0 %v1791
  %v1912 = vpop.f32.mrf.mxu0
  %v1913 = vadd.f32 0.0, %v1912
  %v1914 = vpop.f32.mrf.mxu0
  %1915 = vmatprep.mubr.f32.mxu0 0.0
  %1916 = vmatmul.mubr.f32.gmra.mxu0 %v1794
  %v1917 = vpop.f32.mrf.mxu0
  %v1918 = vadd.f32 0.0, %v1917
  %v1919 = vpop.f32.mrf.mxu0
  %1920 = vmatprep.mubr.f32.mxu0 0.0
  %1921 = vmatmul.mubr.f32.gmra.mxu0 %v1797
  %v1922 = vpop.f32.mrf.mxu0
  %v1923 = vadd.f32 0.0, %v1922
  %v1924 = vpop.f32.mrf.mxu0
  %1925 = vmatprep.mubr.f32.mxu0 0.0
  %1926 = vmatmul.mubr.f32.gmra.mxu0 %v1800
  %v1927 = vpop.f32.mrf.mxu0
  %v1928 = vadd.f32 0.0, %v1927
  %v1929 = vpop.f32.mrf.mxu0
  %1930 = vmatprep.mubr.f32.mxu0 0.0
  %1931 = vmatmul.mubr.f32.gmra.mxu0 %v1803
  %v1932 = vpop.f32.mrf.mxu0
  %v1933 = vadd.f32 0.0, %v1932
  %v1934 = vpop.f32.mrf.mxu0
  %1935 = vmatprep.mubr.f32.mxu0 0.0
  %1936 = vmatmul.mubr.f32.gmra.mxu0 %v1806
  %v1937 = vpop.f32.mrf.mxu0
  %v1938 = vadd.f32 0.0, %v1937
  %v1939 = vpop.f32.mrf.mxu0
  %1940 = vmatprep.mubr.f32.mxu0 0.0
  %1941 = vmatmul.mubr.f32.gmra.mxu0 %v1809
  %v1942 = vpop.f32.mrf.mxu0
  %v1943 = vadd.f32 0.0, %v1942
  %v1944 = vpop.f32.mrf.mxu0
  %1945 = vmatprep.mubr.f32.mxu0 0.0
  %1946 = vmatmul.mubr.f32.gmra.mxu0 %v1812
  %v1947 = vpop.f32.mrf.mxu0
  %v1948 = vadd.f32 0.0, %v1947
  %v1949 = vpop.f32.mrf.mxu0
  %1950 = vmatprep.mubr.f32.mxu0 0.0
  %1951 = vmatmul.mubr.f32.gmra.mxu0 %v1815
  %v1952 = vpop.f32.mrf.mxu0
  %v1953 = vadd.f32 0.0, %v1952
  %v1954 = vpop.f32.mrf.mxu0
  %1955 = vmatprep.mubr.f32.mxu0 0.0
  %1956 = vmatmul.mubr.f32.gmra.mxu0 %v1818
  %v1957 = vpop.f32.mrf.mxu0
  %v1958 = vadd.f32 0.0, %v1957
  %v1959 = vpop.f32.mrf.mxu0
  %1960 = vmatprep.mubr.f32.mxu0 0.0
  %1961 = vmatmul.mubr.f32.gmra.mxu0 %v1821
  %v1962 = vpop.f32.mrf.mxu0
  %v1963 = vadd.f32 0.0, %v1962
  %v1964 = vpop.f32.mrf.mxu0
  %1965 = vmatprep.mubr.f32.mxu0 0.0
  %1966 = vmatmul.mubr.f32.gmra.mxu0 %v1824
  %v1967 = vpop.f32.mrf.mxu0
  %v1968 = vadd.f32 0.0, %v1967
  %v1969 = vpop.f32.mrf.mxu0
  %1970 = vdwg.mxu0
  %v1971 = vsel %vm900, %v1893, 0.0
  %v1972 = vsel %vm900, %v1898, 0.0
  %v1973 = vadd.f32 %v1971, %v1972
  %v1974 = vsel %vm900, %v1903, 0.0
  %v1975 = vadd.f32 %v1973, %v1974
  %v1976 = vsel %vm900, %v1908, 0.0
  %v1977 = vadd.f32 %v1975, %v1976
  %v1978 = vsel %vm900, %v1913, 0.0
  %v1979 = vadd.f32 %v1977, %v1978
  %v1980 = vsel %vm900, %v1918, 0.0
  %v1981 = vadd.f32 %v1979, %v1980
  %v1982 = vsel %vm900, %v1923, 0.0
  %v1983 = vadd.f32 %v1981, %v1982
  %v1984 = vsel %vm900, %v1928, 0.0
  %v1985 = vadd.f32 %v1983, %v1984
  %v1986 = vsel %vm900, %v1933, 0.0
  %v1987 = vadd.f32 %v1985, %v1986
  %v1988 = vsel %vm900, %v1938, 0.0
  %v1989 = vadd.f32 %v1987, %v1988
  %v1990 = vsel %vm900, %v1943, 0.0
  %v1991 = vadd.f32 %v1989, %v1990
  %v1992 = vsel %vm900, %v1948, 0.0
  %v1993 = vadd.f32 %v1991, %v1992
  %v1994 = vsel %vm900, %v1953, 0.0
  %v1995 = vadd.f32 %v1993, %v1994
  %v1996 = vsel %vm900, %v1958, 0.0
  %v1997 = vadd.f32 %v1995, %v1996
  %v1998 = vsel %vm900, %v1963, 0.0
  %v1999 = vadd.f32 %v1997, %v1998
  %v2000 = vsel %vm900, %v1968, 0.0
  %v2001 = vadd.f32 %v1999, %v2000
  %v2002 = vrot.slane %v2001, 4
  %v2003 = vadd.f32 %v2001, %v2002
  %v2004 = vrot.slane %v2003, 2
  %v2005 = vadd.f32 %v2003, %v2004
  %v2006 = vrot.slane %v2005, 1
  %v2007 = vadd.f32 %v2005, %v2006
  %v2008 = vmul.f32 %v1893, %v1893
  %v2009 = vmul.f32 %v1898, %v1898
  %v2010 = vmul.f32 %v1903, %v1903
  %v2011 = vmul.f32 %v1908, %v1908
  %v2012 = vmul.f32 %v1913, %v1913
  %v2013 = vmul.f32 %v1918, %v1918
  %v2014 = vmul.f32 %v1923, %v1923
  %v2015 = vmul.f32 %v1928, %v1928
  %v2016 = vmul.f32 %v1933, %v1933
  %v2017 = vmul.f32 %v1938, %v1938
  %v2018 = vmul.f32 %v1943, %v1943
  %v2019 = vmul.f32 %v1948, %v1948
  %v2020 = vmul.f32 %v1953, %v1953
  %v2021 = vmul.f32 %v1958, %v1958
  %v2022 = vmul.f32 %v1963, %v1963
  %v2023 = vmul.f32 %v1968, %v1968
  %v2024 = vsel %vm900, %v2008, 0.0
  %v2025 = vsel %vm900, %v2009, 0.0
  %v2026 = vadd.f32 %v2024, %v2025
  %v2027 = vsel %vm900, %v2010, 0.0
  %v2028 = vadd.f32 %v2026, %v2027
  %v2029 = vsel %vm900, %v2011, 0.0
  %v2030 = vadd.f32 %v2028, %v2029
  %v2031 = vsel %vm900, %v2012, 0.0
  %v2032 = vadd.f32 %v2030, %v2031
  %v2033 = vsel %vm900, %v2013, 0.0
  %v2034 = vadd.f32 %v2032, %v2033
  %v2035 = vsel %vm900, %v2014, 0.0
  %v2036 = vadd.f32 %v2034, %v2035
  %v2037 = vsel %vm900, %v2015, 0.0
  %v2038 = vadd.f32 %v2036, %v2037
  %v2039 = vsel %vm900, %v2016, 0.0
  %v2040 = vadd.f32 %v2038, %v2039
  %v2041 = vsel %vm900, %v2017, 0.0
  %v2042 = vadd.f32 %v2040, %v2041
  %v2043 = vsel %vm900, %v2018, 0.0
  %v2044 = vadd.f32 %v2042, %v2043
  %v2045 = vsel %vm900, %v2019, 0.0
  %v2046 = vadd.f32 %v2044, %v2045
  %v2047 = vsel %vm900, %v2020, 0.0
  %v2048 = vadd.f32 %v2046, %v2047
  %v2049 = vsel %vm900, %v2021, 0.0
  %v2050 = vadd.f32 %v2048, %v2049
  %v2051 = vsel %vm900, %v2022, 0.0
  %v2052 = vadd.f32 %v2050, %v2051
  %v2053 = vsel %vm900, %v2023, 0.0
  %v2054 = vadd.f32 %v2052, %v2053
  %v2055 = vrot.slane %v2054, 4
  %v2056 = vadd.f32 %v2054, %v2055
  %v2057 = vrot.slane %v2056, 2
  %v2058 = vadd.f32 %v2056, %v2057
  %v2059 = vrot.slane %v2058, 1
  %v2060 = vadd.f32 %v2058, %v2059
  %v2061 = vmul.f32 %v2007, 0.0078125
  %v2062 = vmul.f32 %v2060, 0.0078125
  %v2063 = vmul.f32 %v2061, %v2061
  %v2064 = vsub.f32 %v2062, %v2063
  %v2065 = vld [vmem:[%s5] sm:$0x1]
  %v2066 = vadd.f32 %v2064, 1e-05
  %v2067 = vrsqrt.pop %v2066
  %v2068 = vmul.f32 %v2065, %v2067
  %v2069 = vld [vmem:[%s6] sm:$0x1]
  %v2070 = vmul.f32 %v2061, %v2068
  %v2071 = vsub.f32 %v2069, %v2070
  %v2073 = vlaneseq
  %v2074 = vshrl.u32 %v2073, 7
  %v2075 = vsub.s32 0, %v2074
  %v2076 = vrot.slane %v2068, %v2075
  %v2078 = vmul.f32 %v1893, %v2076
  %v2079 = vmul.f32 %v1898, %v2076
  %v2080 = vmul.f32 %v1903, %v2076
  %v2081 = vmul.f32 %v1908, %v2076
  %v2082 = vmul.f32 %v1913, %v2076
  %v2083 = vmul.f32 %v1918, %v2076
  %v2084 = vmul.f32 %v1923, %v2076
  %v2085 = vmul.f32 %v1928, %v2076
  %v2086 = vmul.f32 %v1933, %v2076
  %v2087 = vmul.f32 %v1938, %v2076
  %v2088 = vmul.f32 %v1943, %v2076
  %v2089 = vmul.f32 %v1948, %v2076
  %v2090 = vmul.f32 %v1953, %v2076
  %v2091 = vmul.f32 %v1958, %v2076
  %v2092 = vmul.f32 %v1963, %v2076
  %v2093 = vmul.f32 %v1968, %v2076
  %v2095 = vlaneseq
  %v2096 = vshrl.u32 %v2095, 7
  %v2097 = vsub.s32 0, %v2096
  %v2098 = vrot.slane %v2071, %v2097
  %v2100 = vadd.f32 %v2078, %v2098
  %v2101 = vadd.f32 %v2079, %v2098
  %v2102 = vadd.f32 %v2080, %v2098
  %v2103 = vadd.f32 %v2081, %v2098
  %v2104 = vadd.f32 %v2082, %v2098
  %v2105 = vadd.f32 %v2083, %v2098
  %v2106 = vadd.f32 %v2084, %v2098
  %v2107 = vadd.f32 %v2085, %v2098
  %v2108 = vadd.f32 %v2086, %v2098
  %v2109 = vadd.f32 %v2087, %v2098
  %v2110 = vadd.f32 %v2088, %v2098
  %v2111 = vadd.f32 %v2089, %v2098
  %v2112 = vadd.f32 %v2090, %v2098
  %v2113 = vadd.f32 %v2091, %v2098
  %v2114 = vadd.f32 %v2092, %v2098
  %v2115 = vadd.f32 %v2093, %v2098
  %v2116 = vmax.f32 %v2100, 0.0
  %v2117 = vmax.f32 %v2101, 0.0
  %v2118 = vmax.f32 %v2102, 0.0
  %v2119 = vmax.f32 %v2103, 0.0
  %v2120 = vmax.f32 %v2104, 0.0
  %v2121 = vmax.f32 %v2105, 0.0
  %v2122 = vmax.f32 %v2106, 0.0
  %v2123 = vmax.f32 %v2107, 0.0
  %v2124 = vmax.f32 %v2108, 0.0
  %v2125 = vmax.f32 %v2109, 0.0
  %v2126 = vmax.f32 %v2110, 0.0
  %v2127 = vmax.f32 %v2111, 0.0
  %v2128 = vmax.f32 %v2112, 0.0
  %v2129 = vmax.f32 %v2113, 0.0
  %v2130 = vmax.f32 %v2114, 0.0
  %v2131 = vmax.f32 %v2115, 0.0
  %2132 = vxpose.xlu0.b32.start [1/16] %v2116, 128
  %2133 = vxpose.xlu0.b32.cont [2/16] %v2117, 128
  %2134 = vxpose.xlu0.b32.cont [3/16] %v2118, 128
  %2135 = vxpose.xlu0.b32.cont [4/16] %v2119, 128
  %2136 = vxpose.xlu0.b32.cont [5/16] %v2120, 128
  %2137 = vxpose.xlu0.b32.cont [6/16] %v2121, 128
  %2138 = vxpose.xlu0.b32.cont [7/16] %v2122, 128
  %2139 = vxpose.xlu0.b32.cont [8/16] %v2123, 128
  %2140 = vxpose.xlu0.b32.cont [9/16] 0.0, 128
  %2141 = vxpose.xlu0.b32.cont [10/16] 0.0, 128
  %2142 = vxpose.xlu0.b32.cont [11/16] 0.0, 128
  %2143 = vxpose.xlu0.b32.cont [12/16] 0.0, 128
  %2144 = vxpose.xlu0.b32.cont [13/16] 0.0, 128
  %2145 = vxpose.xlu0.b32.cont [14/16] 0.0, 128
  %2146 = vxpose.xlu0.b32.cont [15/16] 0.0, 128
  %2147 = vxpose.xlu0.b32.end [16/16] 0.0, 128
  %v2148 = vpop.trf.xlu0
  %v2149 = vpop.trf.xlu0
  %v2150 = vpop.trf.xlu0
  %v2151 = vpop.trf.xlu0
  %v2152 = vpop.trf.xlu0
  %v2153 = vpop.trf.xlu0
  %v2154 = vpop.trf.xlu0
  %v2155 = vpop.trf.xlu0
  %v2156 = vpop.trf.xlu0
  %v2157 = vpop.trf.xlu0
  %v2158 = vpop.trf.xlu0
  %v2159 = vpop.trf.xlu0
  %v2160 = vpop.trf.xlu0
  %v2161 = vpop.trf.xlu0
  %v2162 = vpop.trf.xlu0
  %v2163 = vpop.trf.xlu0
  %2164 = vxpose.xlu0.b32.start [1/16] %v2124, 128
  %2165 = vxpose.xlu0.b32.cont [2/16] %v2125, 128
  %2166 = vxpose.xlu0.b32.cont [3/16] %v2126, 128
  %2167 = vxpose.xlu0.b32.cont [4/16] %v2127, 128
  %2168 = vxpose.xlu0.b32.cont [5/16] %v2128, 128
  %2169 = vxpose.xlu0.b32.cont [6/16] %v2129, 128
  %2170 = vxpose.xlu0.b32.cont [7/16] %v2130, 128
  %2171 = vxpose.xlu0.b32.cont [8/16] %v2131, 128
  %2172 = vxpose.xlu0.b32.cont [9/16] 0.0, 128
  %2173 = vxpose.xlu0.b32.cont [10/16] 0.0, 128
  %2174 = vxpose.xlu0.b32.cont [11/16] 0.0, 128
  %2175 = vxpose.xlu0.b32.cont [12/16] 0.0, 128
  %2176 = vxpose.xlu0.b32.cont [13/16] 0.0, 128
  %2177 = vxpose.xlu0.b32.cont [14/16] 0.0, 128
  %2178 = vxpose.xlu0.b32.cont [15/16] 0.0, 128
  %2179 = vxpose.xlu0.b32.end [16/16] 0.0, 128
  %v2180 = vpop.trf.xlu0
  %v2181 = vpop.trf.xlu0
  %v2182 = vpop.trf.xlu0
  %v2183 = vpop.trf.xlu0
  %v2184 = vpop.trf.xlu0
  %v2185 = vpop.trf.xlu0
  %v2186 = vpop.trf.xlu0
  %v2187 = vpop.trf.xlu0
  %v2188 = vpop.trf.xlu0
  %v2189 = vpop.trf.xlu0
  %v2190 = vpop.trf.xlu0
  %v2191 = vpop.trf.xlu0
  %v2192 = vpop.trf.xlu0
  %v2193 = vpop.trf.xlu0
  %v2194 = vpop.trf.xlu0
  %v2195 = vpop.trf.xlu0
  %2196 = vst.msk [vmem:[%s7] sm:$0xff] %vm639, %v2148
  %2197 = vst.msk [vmem:[%s7 + $0x8] sm:$0xff] %vm639, %v2180
  // Predicated region
  $region30: #{part_dwt3_forward.1} parent=0 // pred_check
    _
  $region31: #{part_dwt3_forward.1} parent=0 // pred_check_branch
    %2199 = sbr.rel (0) target = $region33
  $region32: #{part_dwt3_forward.1} parent=0 // pred_region
    _
  $region33: #{part_dwt3_forward.1} parent=0 // pred_fallthru
    _
  // Predicated region
  $region34: #{part_dwt3_forward.1} parent=0 // pred_check
    _
  $region35: #{part_dwt3_forward.1} parent=0 // pred_check_branch
    %2201 = sbr.rel (0) target = $region37
  $region36: #{part_dwt3_forward.1} parent=0 // pred_region
    _
  $region37: #{part_dwt3_forward.1} parent=0 // pred_fallthru
    _

</llo_original>
